<compile_context>
chip_gen: v7x
topology: tpu7x:2x2x1
jax: 0.10.0
libtpu: 0.0.40
codegen_flags: <defaults>
</compile_context>

<pallas_src>
import math
import functools

import numpy as np
import jax
import jax.numpy as jnp
from jax.experimental import pallas as pl
from jax.experimental.pallas import tpu as pltpu


# ----------------------------------------------------------------------------
# Fused multi-head attention kernel: grid = (B, T // tq)
# ----------------------------------------------------------------------------
def _mha_kernel(lens_ref,                     # scalar prefetch: (B,) int32
                x_ref, tmat_ref,              # (1,T,D), (1,tq,T)
                wqkv_ref, bqkv_ref,           # (D,3D), (1,3D)
                w1_ref, b1_ref, w2t_ref, b2_ref,   # temporal bias MLP params
                wo_ref, bo_ref,               # (D,No), (1,No)  (lane-padded)
                out_ref,                      # (1,tq,No)
                qkv_scratch,                  # VMEM (T, 3D) f32
                *, T, D, H, dk, tq, scale, add_cls):
    b = pl.program_id(0)
    qi = pl.program_id(1)
    NEG = jnp.float32(-1e30)   # finite sentinel: no exp(-inf - -inf) NaN path

    # ---- once per batch element: fused QKV projection into VMEM scratch ----
    @pl.when(qi == 0)
    def _():
        x = x_ref[0]                                              # (T, D)
        qkv_scratch[...] = (jnp.dot(x, wqkv_ref[...],
                                    preferred_element_type=jnp.float32)
                            + bqkv_ref[...])

    q_start = pl.multiple_of(qi * tq, tq)
    qkv_tile = qkv_scratch[pl.ds(q_start, tq), :]                 # (tq, 3D)
    q_tile = qkv_tile[:, 0:D]                                     # (tq, D)
    k_full = qkv_scratch[:, D:2 * D]                              # (T, D)
    v_full = qkv_scratch[:, 2 * D:3 * D]                          # (T, D)

    # ---- temporal bias MLP, fused (no HBM round trip) ----
    tm = 1.0 / jnp.log(jnp.float32(math.e) + tmat_ref[0])         # (tq, T)
    h1 = tm[:, :, None] * w1_ref[...] + b1_ref[...]               # (tq, T, tbd)
    h1 = jnp.where(h1 >= 0.0, h1, 0.2 * h1)                       # leaky_relu(0.2)
    tbias = jnp.sum(h1 * w2t_ref[...], axis=-1) + b2_ref[...]     # (tq, T)

    # ---- combined key-padding + causal mask (single where) ----
    length = lens_ref[b]
    row = q_start + jax.lax.broadcasted_iota(jnp.int32, (tq, T), 0)
    col = jax.lax.broadcasted_iota(jnp.int32, (tq, T), 1)
    causal_ok = col <= row
    if add_cls:
        causal_ok = jnp.logical_or(causal_ok, row == 0)           # CLS row sees all
    allowed = jnp.logical_and(col < length, causal_ok)

    # ---- per-head attention (scores inherently have K = dk) ----
    heads = []
    for h in range(H):
        qh = q_tile[:, h * dk:(h + 1) * dk]
        kh = k_full[:, h * dk:(h + 1) * dk]
        vh = v_full[:, h * dk:(h + 1) * dk]

        s = jax.lax.dot_general(qh, kh, (((1,), (1,)), ((), ())),
                                preferred_element_type=jnp.float32) * scale
        s = s + tbias
        s = jnp.where(allowed, s, NEG)

        m = jnp.max(s, axis=-1, keepdims=True)
        e = jnp.exp(s - m)
        l = jnp.sum(e, axis=-1, keepdims=True)
        pv = jnp.dot(e, vh, preferred_element_type=jnp.float32)   # (tq, dk)
        # normalize the small (tq,dk) result, not the (tq,T) probs; EUP recip
        heads.append(pv * pl.reciprocal(l, approx=True))

    heads_cat = jnp.concatenate(heads, axis=1)                    # (tq, D)

    # ---- single full-width output projection (lane-padded to No) ----
    out = (jnp.dot(heads_cat, wo_ref[...], preferred_element_type=jnp.float32)
           + bo_ref[...])                                         # (tq, No)
    out_ref[0] = out.astype(out_ref.dtype)


def multi_headed_attention_pallas(x, lengths, batch_temporal_mat, params, *,
                                  num_heads, add_cls=True, tq=None):
    B, T, D = x.shape
    assert D % num_heads == 0
    dk = D // num_heads
    dim_out = params["wo"].shape[1]
    scale = dk ** (-0.5)

    if tq is None:
        tq = T if T <= 128 else 128
    assert T % tq == 0 and (tq == T or tq % 8 == 0)
    QT = T // tq

    # Pack QKV weights -> one wide matmul inside the kernel.
    wqkv = jnp.concatenate([params["wq"], params["wk"], params["wv"]], axis=1)
    bqkv = jnp.concatenate([params["bq"], params["bk"], params["bv"]], axis=1)

    # Lane-dense output: pad projection width to a multiple of 128, slice after.
    No = ((dim_out + 127) // 128) * 128
    wo_pad = jnp.zeros((D, No), jnp.float32).at[:, :dim_out].set(params["wo"])
    bo_pad = jnp.zeros((1, No), jnp.float32).at[:, :dim_out].set(params["bo"])

    tbd = params["w1"].shape[1]
    lengths = jnp.asarray(lengths, jnp.int32)

    kernel = functools.partial(_mha_kernel, T=T, D=D, H=num_heads, dk=dk,
                               tq=tq, scale=scale, add_cls=add_cls)

    grid_spec = pltpu.PrefetchScalarGridSpec(
        num_scalar_prefetch=1,
        grid=(B, QT),
        in_specs=[
            pl.BlockSpec((1, T, D), lambda b, qi, lens: (b, 0, 0)),     # x (full seq)
            pl.BlockSpec((1, tq, T), lambda b, qi, lens: (b, qi, 0)),   # temporal mat tile
            pl.BlockSpec((D, 3 * D), lambda b, qi, lens: (0, 0)),       # packed Wqkv
            pl.BlockSpec((1, 3 * D), lambda b, qi, lens: (0, 0)),       # packed bqkv
            pl.BlockSpec((1, tbd), lambda b, qi, lens: (0, 0)),         # w1
            pl.BlockSpec((1, tbd), lambda b, qi, lens: (0, 0)),         # b1
            pl.BlockSpec((1, tbd), lambda b, qi, lens: (0, 0)),         # w2 (pre-transposed)
            pl.BlockSpec((1, 1), lambda b, qi, lens: (0, 0)),           # b2
            pl.BlockSpec((D, No), lambda b, qi, lens: (0, 0)),          # Wo (padded)
            pl.BlockSpec((1, No), lambda b, qi, lens: (0, 0)),          # bo (padded)
        ],
        out_specs=pl.BlockSpec((1, tq, No), lambda b, qi, lens: (b, qi, 0)),
        scratch_shapes=[pltpu.VMEM((T, 3 * D), jnp.float32)],
    )

    out = pl.pallas_call(
        kernel,
        out_shape=jax.ShapeDtypeStruct((B, T, No), jnp.float32),
        grid_spec=grid_spec,
        compiler_params=pltpu.CompilerParams(
            # B parallel (megacore); qi must be sequential because the per-batch
            # QKV scratch is filled at qi == 0.
            dimension_semantics=("parallel", "arbitrary"),
            vmem_limit_bytes=32 * 1024 * 1024),
    )(lengths, x, batch_temporal_mat, wqkv, bqkv,
      params["w1"], params["b1"], params["w2t"], params["b2"],
      wo_pad, bo_pad)
    return out[:, :, :dim_out]


# ----------------------------------------------------------------------------
# Pure-JAX reference (mirrors the PyTorch forward exactly)
# ----------------------------------------------------------------------------
def reference_forward(x, padding_masks, batch_temporal_mat, p, *, num_heads,
                      add_cls=True):
    B, T, D = x.shape
    dk = D // num_heads
    scale = dk ** (-0.5)

    def lin(a, w, b):
        return a @ w + b

    q = lin(x, p["wq"], p["bq"][0]).reshape(B, T, num_heads, dk).transpose(0, 2, 1, 3)
    k = lin(x, p["wk"], p["bk"][0]).reshape(B, T, num_heads, dk).transpose(0, 2, 1, 3)
    v = lin(x, p["wv"], p["bv"][0]).reshape(B, T, num_heads, dk).transpose(0, 2, 1, 3)

    scores = jnp.einsum("bhqd,bhkd->bhqk", q, k) * scale

    tm = 1.0 / jnp.log(math.e + batch_temporal_mat)
    h1 = tm[..., None] * p["w1"][0] + p["b1"][0]
    h1 = jnp.where(h1 >= 0.0, h1, 0.2 * h1)
    tbias = jnp.sum(h1 * p["w2t"][0], axis=-1) + p["b2"][0, 0]       # (B,T,T)
    scores = scores + tbias[:, None, :, :]

    scores = jnp.where(padding_masks[:, None, :, :] > 0.5, scores, -jnp.inf)

    row = np.arange(T)[:, None]
    col = np.arange(T)[None, :]
    fut = col > row
    if add_cls:
        fut = fut & (row > 0)
    scores = jnp.where(jnp.asarray(fut)[None, None], -jnp.inf, scores)

    pattn = jax.nn.softmax(scores, axis=-1)
    out = jnp.einsum("bhqk,bhkd->bhqd", pattn, v)
    out = out.transpose(0, 2, 1, 3).reshape(B, T, D)
    out = out @ p["wo"] + p["bo"][0]
    return out


# ----------------------------------------------------------------------------
# Main
# ----------------------------------------------------------------------------
if __name__ == "__main__":
    B, T, D = 2, 16, 32
    num_heads = 4
    dim_out = 48
    temporal_bias_dim = 64
    tq = 8                      # 2 query tiles per batch -> exercises the grid

    key = jax.random.PRNGKey(0)
    keys = jax.random.split(key, 16)
    ws = 0.05  # weight scale

    params = {
        "wq": ws * jax.random.normal(keys[0], (D, D), jnp.float32),
        "bq": ws * jax.random.normal(keys[1], (1, D), jnp.float32),
        "wk": ws * jax.random.normal(keys[2], (D, D), jnp.float32),
        "bk": ws * jax.random.normal(keys[3], (1, D), jnp.float32),
        "wv": ws * jax.random.normal(keys[4], (D, D), jnp.float32),
        "bv": ws * jax.random.normal(keys[5], (1, D), jnp.float32),
        "wo": ws * jax.random.normal(keys[6], (D, dim_out), jnp.float32),
        "bo": ws * jax.random.normal(keys[7], (1, dim_out), jnp.float32),
        # temporal bias MLP: Linear(1, tbd) then Linear(tbd, 1); second weight
        # is stored pre-transposed as (1, tbd).
        "w1": ws * jax.random.normal(keys[8], (1, temporal_bias_dim), jnp.float32),
        "b1": ws * jax.random.normal(keys[9], (1, temporal_bias_dim), jnp.float32),
        "w2t": ws * jax.random.normal(keys[10], (1, temporal_bias_dim), jnp.float32),
        "b2": ws * jax.random.normal(keys[11], (1, 1), jnp.float32),
    }

    x = jax.random.normal(keys[12], (B, T, D), jnp.float32)
    batch_temporal_mat = jax.random.uniform(keys[13], (B, T, T), jnp.float32,
                                            minval=0.0, maxval=100.0)

    # Key-padding: batch 0 fully valid, batch 1 has last 3 key positions padded.
    lengths = np.array([T, T - 3], np.int32)

    # Dense (B,T,T) mask for the reference (matches the PyTorch (B,1,T,T) mask).
    pad_np = np.zeros((B, T, T), np.float32)
    for b in range(B):
        pad_np[b, :, :lengths[b]] = 1.0
    padding_masks = jnp.asarray(pad_np)

    out = multi_headed_attention_pallas(x, lengths, batch_temporal_mat, params,
                                        num_heads=num_heads, add_cls=True, tq=tq)
    out = jax.block_until_ready(out)

    ref = reference_forward(x, padding_masks, batch_temporal_mat, params,
                            num_heads=num_heads, add_cls=True)
    ref = jax.block_until_ready(ref)

    np.testing.assert_allclose(np.asarray(out), np.asarray(ref),
                               rtol=2e-2, atol=2e-2)
    print("KERNEL_OK")
</pallas_src>

<mosaic_0001>
module attributes {stable_mosaic.version = 11 : i64} {
  func.func @_mha_kernel(%arg0: i32, %arg1: i32, %arg2: memref<2xi32, #tpu.memory_space<smem>>, %arg3: memref<1x16x32xf32, #tpu.memory_space<vmem>>, %arg4: memref<1x8x16xf32, #tpu.memory_space<vmem>>, %arg5: memref<32x96xf32, #tpu.memory_space<vmem>>, %arg6: memref<1x96xf32, #tpu.memory_space<vmem>>, %arg7: memref<1x64xf32, #tpu.memory_space<vmem>>, %arg8: memref<1x64xf32, #tpu.memory_space<vmem>>, %arg9: memref<1x64xf32, #tpu.memory_space<vmem>>, %arg10: memref<1x1xf32, #tpu.memory_space<vmem>>, %arg11: memref<32x128xf32, #tpu.memory_space<vmem>>, %arg12: memref<1x128xf32, #tpu.memory_space<vmem>>, %arg13: memref<1x8x128xf32, #tpu.memory_space<vmem>>, %arg14: memref<16x96xf32, #tpu.memory_space<vmem>>) attributes {dimension_semantics = [#tpu.dimension_semantics<parallel>, #tpu.dimension_semantics<arbitrary>], iteration_bounds = array<i64: 2, 2>, scalar_prefetch = 1 : i64, scratch_operands = 1 : i64, tpu.core_type = #tpu.core_type<tc>, window_params = [{transform_indices = @transform_0, window_bounds = array<i64: 1, 16, 32>}, {transform_indices = @transform_1, window_bounds = array<i64: 1, 8, 16>}, {pipeline_mode = #tpu.pipeline_mode<synchronous>, transform_indices = @transform_2, window_bounds = array<i64: 32, 96>}, {pipeline_mode = #tpu.pipeline_mode<synchronous>, transform_indices = @transform_3, window_bounds = array<i64: 1, 96>}, {pipeline_mode = #tpu.pipeline_mode<synchronous>, transform_indices = @transform_4, window_bounds = array<i64: 1, 64>}, {pipeline_mode = #tpu.pipeline_mode<synchronous>, transform_indices = @transform_5, window_bounds = array<i64: 1, 64>}, {pipeline_mode = #tpu.pipeline_mode<synchronous>, transform_indices = @transform_6, window_bounds = array<i64: 1, 64>}, {pipeline_mode = #tpu.pipeline_mode<synchronous>, transform_indices = @transform_7, window_bounds = array<i64: 1, 1>}, {pipeline_mode = #tpu.pipeline_mode<synchronous>, transform_indices = @transform_8, window_bounds = array<i64: 32, 128>}, {pipeline_mode = #tpu.pipeline_mode<synchronous>, transform_indices = @transform_9, window_bounds = array<i64: 1, 128>}, {transform_indices = @transform_10, window_bounds = array<i64: 1, 8, 128>}]} {
    %c0_i32 = arith.constant 0 : i32
    %0 = arith.cmpi eq, %arg1, %c0_i32 : i32
    %1 = arith.extui %0 : i1 to i32
    %c0_i32_0 = arith.constant 0 : i32
    %2 = arith.cmpi ne, %1, %c0_i32_0 : i32
    scf.if %2 {
      %c0_51 = arith.constant 0 : index
      %c0_52 = arith.constant 0 : index
      %c0_53 = arith.constant 0 : index
      %142 = vector.load %arg3[%c0_51, %c0_52, %c0_53] : memref<1x16x32xf32, #tpu.memory_space<vmem>>, vector<1x16x32xf32>
      %143 = vector.shape_cast %142 : vector<1x16x32xf32> to vector<16x32xf32>
      %c0_54 = arith.constant 0 : index
      %c0_55 = arith.constant 0 : index
      %144 = vector.load %arg5[%c0_54, %c0_55] : memref<32x96xf32, #tpu.memory_space<vmem>>, vector<32x96xf32>
      %cst_56 = arith.constant dense<0.000000e+00> : vector<16x96xf32>
      %145 = tpu.matmul %143, %144, %cst_56 {dimension_numbers = #tpu.dot_dimension_numbers<[1], [0], [0], [1], [0, 0, 1, 1], [], []>} : vector<16x32xf32>, vector<32x96xf32>, vector<16x96xf32> -> vector<16x96xf32>
      %c0_57 = arith.constant 0 : index
      %c0_58 = arith.constant 0 : index
      %146 = vector.load %arg6[%c0_57, %c0_58] : memref<1x96xf32, #tpu.memory_space<vmem>>, vector<1x96xf32>
      %147 = vector.broadcast %146 : vector<1x96xf32> to vector<16x96xf32>
      %148 = arith.addf %145, %147 : vector<16x96xf32>
      %c0_59 = arith.constant 0 : index
      %c0_60 = arith.constant 0 : index
      %149 = vector.load %arg14[%c0_59, %c0_60] : memref<16x96xf32, #tpu.memory_space<vmem>>, vector<16x96xf32>
      tpu.vector_store %arg14[%c0_59, %c0_60], %148 {strides = array<i32>} : memref<16x96xf32, #tpu.memory_space<vmem>>, vector<16x96xf32>,
    } else {
    }
    %c8_i32 = arith.constant 8 : i32
    %3 = arith.muli %arg1, %c8_i32 : i32
    %4 = tpu.assume_multiple %3, 8 : i32
    %5 = arith.index_cast %4 : i32 to index
    %c0 = arith.constant 0 : index
    %6 = vector.load %arg14[%5, %c0] : memref<16x96xf32, #tpu.memory_space<vmem>>, vector<8x96xf32>
    %7 = vector.extract_strided_slice %6 {offsets = [0, 0], sizes = [8, 32], strides = [1, 1]} : vector<8x96xf32> to vector<8x32xf32>
    %c0_1 = arith.constant 0 : index
    %c32 = arith.constant 32 : index
    %8 = vector.load %arg14[%c0_1, %c32] : memref<16x96xf32, #tpu.memory_space<vmem>>, vector<16x32xf32>
    %c0_2 = arith.constant 0 : index
    %c64 = arith.constant 64 : index
    %9 = vector.load %arg14[%c0_2, %c64] : memref<16x96xf32, #tpu.memory_space<vmem>>, vector<16x32xf32>
    %c0_3 = arith.constant 0 : index
    %c0_4 = arith.constant 0 : index
    %c0_5 = arith.constant 0 : index
    %10 = vector.load %arg4[%c0_3, %c0_4, %c0_5] : memref<1x8x16xf32, #tpu.memory_space<vmem>>, vector<1x8x16xf32>
    %11 = vector.shape_cast %10 : vector<1x8x16xf32> to vector<8x16xf32>
    %cst = arith.constant 2.71828175 : f32
    %12 = vector.broadcast %cst : f32 to vector<8x16xf32>
    %13 = arith.addf %12, %11 : vector<8x16xf32>
    %14 = math.log %13 : vector<8x16xf32>
    %cst_6 = arith.constant 1.000000e+00 : f32
    %15 = vector.broadcast %cst_6 : f32 to vector<8x16xf32>
    %16 = arith.divf %15, %14 : vector<8x16xf32>
    %17 = vector.shape_cast %16 : vector<8x16xf32> to vector<8x16x1xf32>
    %c0_7 = arith.constant 0 : index
    %c0_8 = arith.constant 0 : index
    %18 = vector.load %arg7[%c0_7, %c0_8] : memref<1x64xf32, #tpu.memory_space<vmem>>, vector<1x64xf32>
    %19 = vector.shape_cast %18 : vector<1x64xf32> to vector<1x1x64xf32>
    %20 = vector.broadcast %17 : vector<8x16x1xf32> to vector<8x16x64xf32>
    %21 = vector.broadcast %19 : vector<1x1x64xf32> to vector<8x16x64xf32>
    %22 = arith.mulf %20, %21 : vector<8x16x64xf32>
    %c0_9 = arith.constant 0 : index
    %c0_10 = arith.constant 0 : index
    %23 = vector.load %arg8[%c0_9, %c0_10] : memref<1x64xf32, #tpu.memory_space<vmem>>, vector<1x64xf32>
    %24 = vector.shape_cast %23 : vector<1x64xf32> to vector<1x1x64xf32>
    %25 = vector.broadcast %24 : vector<1x1x64xf32> to vector<8x16x64xf32>
    %26 = arith.addf %22, %25 : vector<8x16x64xf32>
    %cst_11 = arith.constant 0.000000e+00 : f32
    %27 = vector.broadcast %cst_11 : f32 to vector<8x16x64xf32>
    %28 = arith.cmpf oge, %26, %27 : vector<8x16x64xf32>
    %cst_12 = arith.constant 2.000000e-01 : f32
    %29 = vector.broadcast %cst_12 : f32 to vector<8x16x64xf32>
    %30 = arith.mulf %29, %26 : vector<8x16x64xf32>
    %31 = arith.select %28, %26, %30 : vector<8x16x64xi1>, vector<8x16x64xf32>
    %c0_13 = arith.constant 0 : index
    %c0_14 = arith.constant 0 : index
    %32 = vector.load %arg9[%c0_13, %c0_14] : memref<1x64xf32, #tpu.memory_space<vmem>>, vector<1x64xf32>
    %33 = vector.shape_cast %32 : vector<1x64xf32> to vector<1x1x64xf32>
    %34 = vector.broadcast %33 : vector<1x1x64xf32> to vector<8x16x64xf32>
    %35 = arith.mulf %31, %34 : vector<8x16x64xf32>
    %cst_15 = arith.constant dense<0.000000e+00> : vector<8x16xf32>
    %36 = vector.multi_reduction <add>, %35, %cst_15 [2] : vector<8x16x64xf32> to vector<8x16xf32>
    %c0_16 = arith.constant 0 : index
    %c0_17 = arith.constant 0 : index
    %37 = vector.load %arg10[%c0_16, %c0_17] : memref<1x1xf32, #tpu.memory_space<vmem>>, vector<1x1xf32>
    %38 = vector.broadcast %37 : vector<1x1xf32> to vector<8x16xf32>
    %39 = arith.addf %36, %38 : vector<8x16xf32>
    %40 = arith.index_cast %arg0 : i32 to index
    %41 = memref.load %arg2[%40] : memref<2xi32, #tpu.memory_space<smem>>
    %42 = tpu.iota {dimensions = array<i32: 0>} : vector<8x16xi32>
    %43 = vector.broadcast %4 : i32 to vector<8x16xi32>
    %44 = arith.addi %43, %42 : vector<8x16xi32>
    %45 = tpu.iota {dimensions = array<i32: 1>} : vector<8x16xi32>
    %46 = arith.cmpi sle, %45, %44 : vector<8x16xi32>
    %c0_i32_18 = arith.constant 0 : i32
    %47 = vector.broadcast %c0_i32_18 : i32 to vector<8x16xi32>
    %48 = arith.cmpi eq, %44, %47 : vector<8x16xi32>
    %49 = arith.ori %46, %48 : vector<8x16xi1>
    %50 = vector.broadcast %41 : i32 to vector<8x16xi32>
    %51 = arith.cmpi slt, %45, %50 : vector<8x16xi32>
    %52 = arith.andi %51, %49 : vector<8x16xi1>
    %53 = vector.extract_strided_slice %7 {offsets = [0, 0], sizes = [8, 8], strides = [1, 1]} : vector<8x32xf32> to vector<8x8xf32>
    %54 = vector.extract_strided_slice %8 {offsets = [0, 0], sizes = [16, 8], strides = [1, 1]} : vector<16x32xf32> to vector<16x8xf32>
    %55 = vector.extract_strided_slice %9 {offsets = [0, 0], sizes = [16, 8], strides = [1, 1]} : vector<16x32xf32> to vector<16x8xf32>
    %cst_19 = arith.constant dense<0.000000e+00> : vector<8x16xf32>
    %56 = tpu.matmul %53, %54, %cst_19 {dimension_numbers = #tpu.dot_dimension_numbers<[1], [1], [0], [0], [0, 0, 1, 0], [], []>} : vector<8x8xf32>, vector<16x8xf32>, vector<8x16xf32> -> vector<8x16xf32>
    %cst_20 = arith.constant 0.353553385 : f32
    %57 = vector.broadcast %cst_20 : f32 to vector<8x16xf32>
    %58 = arith.mulf %56, %57 : vector<8x16xf32>
    %59 = arith.addf %58, %39 : vector<8x16xf32>
    %cst_21 = arith.constant -1.000000e+30 : f32
    %60 = vector.broadcast %cst_21 : f32 to vector<8x16xf32>
    %61 = arith.select %52, %59, %60 : vector<8x16xi1>, vector<8x16xf32>
    %cst_22 = arith.constant dense<0xFF800000> : vector<8xf32>
    %62 = vector.multi_reduction <maximumf>, %61, %cst_22 [1] : vector<8x16xf32> to vector<8xf32>
    %63 = vector.shape_cast %62 : vector<8xf32> to vector<8x1xf32>
    %64 = vector.broadcast %63 : vector<8x1xf32> to vector<8x16xf32>
    %65 = arith.subf %61, %64 : vector<8x16xf32>
    %66 = math.exp %65 : vector<8x16xf32>
    %cst_23 = arith.constant dense<0.000000e+00> : vector<8xf32>
    %67 = vector.multi_reduction <add>, %66, %cst_23 [1] : vector<8x16xf32> to vector<8xf32>
    %68 = vector.shape_cast %67 : vector<8xf32> to vector<8x1xf32>
    %cst_24 = arith.constant dense<0.000000e+00> : vector<8x8xf32>
    %69 = tpu.matmul %66, %55, %cst_24 {dimension_numbers = #tpu.dot_dimension_numbers<[1], [0], [0], [1], [0, 0, 1, 1], [], []>} : vector<8x16xf32>, vector<16x8xf32>, vector<8x8xf32> -> vector<8x8xf32>
    %70 = tpu.reciprocal %68 {approx = true} : vector<8x1xf32> -> vector<8x1xf32>
    %71 = vector.broadcast %70 : vector<8x1xf32> to vector<8x8xf32>
    %72 = arith.mulf %69, %71 : vector<8x8xf32>
    %73 = vector.extract_strided_slice %7 {offsets = [0, 8], sizes = [8, 8], strides = [1, 1]} : vector<8x32xf32> to vector<8x8xf32>
    %74 = vector.extract_strided_slice %8 {offsets = [0, 8], sizes = [16, 8], strides = [1, 1]} : vector<16x32xf32> to vector<16x8xf32>
    %75 = vector.extract_strided_slice %9 {offsets = [0, 8], sizes = [16, 8], strides = [1, 1]} : vector<16x32xf32> to vector<16x8xf32>
    %cst_25 = arith.constant dense<0.000000e+00> : vector<8x16xf32>
    %76 = tpu.matmul %73, %74, %cst_25 {dimension_numbers = #tpu.dot_dimension_numbers<[1], [1], [0], [0], [0, 0, 1, 0], [], []>} : vector<8x8xf32>, vector<16x8xf32>, vector<8x16xf32> -> vector<8x16xf32>
    %cst_26 = arith.constant 0.353553385 : f32
    %77 = vector.broadcast %cst_26 : f32 to vector<8x16xf32>
    %78 = arith.mulf %76, %77 : vector<8x16xf32>
    %79 = arith.addf %78, %39 : vector<8x16xf32>
    %cst_27 = arith.constant -1.000000e+30 : f32
    %80 = vector.broadcast %cst_27 : f32 to vector<8x16xf32>
    %81 = arith.select %52, %79, %80 : vector<8x16xi1>, vector<8x16xf32>
    %cst_28 = arith.constant dense<0xFF800000> : vector<8xf32>
    %82 = vector.multi_reduction <maximumf>, %81, %cst_28 [1] : vector<8x16xf32> to vector<8xf32>
    %83 = vector.shape_cast %82 : vector<8xf32> to vector<8x1xf32>
    %84 = vector.broadcast %83 : vector<8x1xf32> to vector<8x16xf32>
    %85 = arith.subf %81, %84 : vector<8x16xf32>
    %86 = math.exp %85 : vector<8x16xf32>
    %cst_29 = arith.constant dense<0.000000e+00> : vector<8xf32>
    %87 = vector.multi_reduction <add>, %86, %cst_29 [1] : vector<8x16xf32> to vector<8xf32>
    %88 = vector.shape_cast %87 : vector<8xf32> to vector<8x1xf32>
    %cst_30 = arith.constant dense<0.000000e+00> : vector<8x8xf32>
    %89 = tpu.matmul %86, %75, %cst_30 {dimension_numbers = #tpu.dot_dimension_numbers<[1], [0], [0], [1], [0, 0, 1, 1], [], []>} : vector<8x16xf32>, vector<16x8xf32>, vector<8x8xf32> -> vector<8x8xf32>
    %90 = tpu.reciprocal %88 {approx = true} : vector<8x1xf32> -> vector<8x1xf32>
    %91 = vector.broadcast %90 : vector<8x1xf32> to vector<8x8xf32>
    %92 = arith.mulf %89, %91 : vector<8x8xf32>
    %93 = vector.extract_strided_slice %7 {offsets = [0, 16], sizes = [8, 8], strides = [1, 1]} : vector<8x32xf32> to vector<8x8xf32>
    %94 = vector.extract_strided_slice %8 {offsets = [0, 16], sizes = [16, 8], strides = [1, 1]} : vector<16x32xf32> to vector<16x8xf32>
    %95 = vector.extract_strided_slice %9 {offsets = [0, 16], sizes = [16, 8], strides = [1, 1]} : vector<16x32xf32> to vector<16x8xf32>
    %cst_31 = arith.constant dense<0.000000e+00> : vector<8x16xf32>
    %96 = tpu.matmul %93, %94, %cst_31 {dimension_numbers = #tpu.dot_dimension_numbers<[1], [1], [0], [0], [0, 0, 1, 0], [], []>} : vector<8x8xf32>, vector<16x8xf32>, vector<8x16xf32> -> vector<8x16xf32>
    %cst_32 = arith.constant 0.353553385 : f32
    %97 = vector.broadcast %cst_32 : f32 to vector<8x16xf32>
    %98 = arith.mulf %96, %97 : vector<8x16xf32>
    %99 = arith.addf %98, %39 : vector<8x16xf32>
    %cst_33 = arith.constant -1.000000e+30 : f32
    %100 = vector.broadcast %cst_33 : f32 to vector<8x16xf32>
    %101 = arith.select %52, %99, %100 : vector<8x16xi1>, vector<8x16xf32>
    %cst_34 = arith.constant dense<0xFF800000> : vector<8xf32>
    %102 = vector.multi_reduction <maximumf>, %101, %cst_34 [1] : vector<8x16xf32> to vector<8xf32>
    %103 = vector.shape_cast %102 : vector<8xf32> to vector<8x1xf32>
    %104 = vector.broadcast %103 : vector<8x1xf32> to vector<8x16xf32>
    %105 = arith.subf %101, %104 : vector<8x16xf32>
    %106 = math.exp %105 : vector<8x16xf32>
    %cst_35 = arith.constant dense<0.000000e+00> : vector<8xf32>
    %107 = vector.multi_reduction <add>, %106, %cst_35 [1] : vector<8x16xf32> to vector<8xf32>
    %108 = vector.shape_cast %107 : vector<8xf32> to vector<8x1xf32>
    %cst_36 = arith.constant dense<0.000000e+00> : vector<8x8xf32>
    %109 = tpu.matmul %106, %95, %cst_36 {dimension_numbers = #tpu.dot_dimension_numbers<[1], [0], [0], [1], [0, 0, 1, 1], [], []>} : vector<8x16xf32>, vector<16x8xf32>, vector<8x8xf32> -> vector<8x8xf32>
    %110 = tpu.reciprocal %108 {approx = true} : vector<8x1xf32> -> vector<8x1xf32>
    %111 = vector.broadcast %110 : vector<8x1xf32> to vector<8x8xf32>
    %112 = arith.mulf %109, %111 : vector<8x8xf32>
    %113 = vector.extract_strided_slice %7 {offsets = [0, 24], sizes = [8, 8], strides = [1, 1]} : vector<8x32xf32> to vector<8x8xf32>
    %114 = vector.extract_strided_slice %8 {offsets = [0, 24], sizes = [16, 8], strides = [1, 1]} : vector<16x32xf32> to vector<16x8xf32>
    %115 = vector.extract_strided_slice %9 {offsets = [0, 24], sizes = [16, 8], strides = [1, 1]} : vector<16x32xf32> to vector<16x8xf32>
    %cst_37 = arith.constant dense<0.000000e+00> : vector<8x16xf32>
    %116 = tpu.matmul %113, %114, %cst_37 {dimension_numbers = #tpu.dot_dimension_numbers<[1], [1], [0], [0], [0, 0, 1, 0], [], []>} : vector<8x8xf32>, vector<16x8xf32>, vector<8x16xf32> -> vector<8x16xf32>
    %cst_38 = arith.constant 0.353553385 : f32
    %117 = vector.broadcast %cst_38 : f32 to vector<8x16xf32>
    %118 = arith.mulf %116, %117 : vector<8x16xf32>
    %119 = arith.addf %118, %39 : vector<8x16xf32>
    %cst_39 = arith.constant -1.000000e+30 : f32
    %120 = vector.broadcast %cst_39 : f32 to vector<8x16xf32>
    %121 = arith.select %52, %119, %120 : vector<8x16xi1>, vector<8x16xf32>
    %cst_40 = arith.constant dense<0xFF800000> : vector<8xf32>
    %122 = vector.multi_reduction <maximumf>, %121, %cst_40 [1] : vector<8x16xf32> to vector<8xf32>
    %123 = vector.shape_cast %122 : vector<8xf32> to vector<8x1xf32>
    %124 = vector.broadcast %123 : vector<8x1xf32> to vector<8x16xf32>
    %125 = arith.subf %121, %124 : vector<8x16xf32>
    %126 = math.exp %125 : vector<8x16xf32>
    %cst_41 = arith.constant dense<0.000000e+00> : vector<8xf32>
    %127 = vector.multi_reduction <add>, %126, %cst_41 [1] : vector<8x16xf32> to vector<8xf32>
    %128 = vector.shape_cast %127 : vector<8xf32> to vector<8x1xf32>
    %cst_42 = arith.constant dense<0.000000e+00> : vector<8x8xf32>
    %129 = tpu.matmul %126, %115, %cst_42 {dimension_numbers = #tpu.dot_dimension_numbers<[1], [0], [0], [1], [0, 0, 1, 1], [], []>} : vector<8x16xf32>, vector<16x8xf32>, vector<8x8xf32> -> vector<8x8xf32>
    %130 = tpu.reciprocal %128 {approx = true} : vector<8x1xf32> -> vector<8x1xf32>
    %131 = vector.broadcast %130 : vector<8x1xf32> to vector<8x8xf32>
    %132 = arith.mulf %129, %131 : vector<8x8xf32>
    %133 = tpu.concatenate %72, %92, %112, %132 in 1 : vector<8x8xf32>, vector<8x8xf32>, vector<8x8xf32>, vector<8x8xf32> -> vector<8x32xf32>
    %c0_43 = arith.constant 0 : index
    %c0_44 = arith.constant 0 : index
    %134 = vector.load %arg11[%c0_43, %c0_44] : memref<32x128xf32, #tpu.memory_space<vmem>>, vector<32x128xf32>
    %cst_45 = arith.constant dense<0.000000e+00> : vector<8x128xf32>
    %135 = tpu.matmul %133, %134, %cst_45 {dimension_numbers = #tpu.dot_dimension_numbers<[1], [0], [0], [1], [0, 0, 1, 1], [], []>} : vector<8x32xf32>, vector<32x128xf32>, vector<8x128xf32> -> vector<8x128xf32>
    %c0_46 = arith.constant 0 : index
    %c0_47 = arith.constant 0 : index
    %136 = vector.load %arg12[%c0_46, %c0_47] : memref<1x128xf32, #tpu.memory_space<vmem>>, vector<1x128xf32>
    %137 = vector.broadcast %136 : vector<1x128xf32> to vector<8x128xf32>
    %138 = arith.addf %135, %137 : vector<8x128xf32>
    %c0_48 = arith.constant 0 : index
    %c0_49 = arith.constant 0 : index
    %c0_50 = arith.constant 0 : index
    %139 = vector.load %arg13[%c0_48, %c0_49, %c0_50] : memref<1x8x128xf32, #tpu.memory_space<vmem>>, vector<1x8x128xf32>
    %140 = vector.shape_cast %139 : vector<1x8x128xf32> to vector<8x128xf32>
    %141 = vector.shape_cast %138 : vector<8x128xf32> to vector<1x8x128xf32>
    tpu.vector_store %arg13[%c0_48, %c0_49, %c0_50], %141 {strides = array<i32>} : memref<1x8x128xf32, #tpu.memory_space<vmem>>, vector<1x8x128xf32>,
    return
  }
  func.func @transform_0(%arg0: i32, %arg1: i32, %arg2: memref<2xi32, #tpu.memory_space<smem>>) -> (i32, i32, i32) {
    %c0_i32 = arith.constant 0 : i32
    %c0_i32_0 = arith.constant 0 : i32
    %c0_i32_1 = arith.constant 0 : i32
    return %arg0, %c0_i32, %c0_i32_0 : i32, i32, i32
  }
  func.func @transform_1(%arg0: i32, %arg1: i32, %arg2: memref<2xi32, #tpu.memory_space<smem>>) -> (i32, i32, i32) {
    %c0_i32 = arith.constant 0 : i32
    %c0_i32_0 = arith.constant 0 : i32
    return %arg0, %arg1, %c0_i32 : i32, i32, i32
  }
  func.func @transform_2(%arg0: i32, %arg1: i32, %arg2: memref<2xi32, #tpu.memory_space<smem>>) -> (i32, i32) {
    %c0_i32 = arith.constant 0 : i32
    %c0_i32_0 = arith.constant 0 : i32
    %c0_i32_1 = arith.constant 0 : i32
    return %c0_i32, %c0_i32_0 : i32, i32
  }
  func.func @transform_3(%arg0: i32, %arg1: i32, %arg2: memref<2xi32, #tpu.memory_space<smem>>) -> (i32, i32) {
    %c0_i32 = arith.constant 0 : i32
    %c0_i32_0 = arith.constant 0 : i32
    %c0_i32_1 = arith.constant 0 : i32
    return %c0_i32, %c0_i32_0 : i32, i32
  }
  func.func @transform_4(%arg0: i32, %arg1: i32, %arg2: memref<2xi32, #tpu.memory_space<smem>>) -> (i32, i32) {
    %c0_i32 = arith.constant 0 : i32
    %c0_i32_0 = arith.constant 0 : i32
    %c0_i32_1 = arith.constant 0 : i32
    return %c0_i32, %c0_i32_0 : i32, i32
  }
  func.func @transform_5(%arg0: i32, %arg1: i32, %arg2: memref<2xi32, #tpu.memory_space<smem>>) -> (i32, i32) {
    %c0_i32 = arith.constant 0 : i32
    %c0_i32_0 = arith.constant 0 : i32
    %c0_i32_1 = arith.constant 0 : i32
    return %c0_i32, %c0_i32_0 : i32, i32
  }
  func.func @transform_6(%arg0: i32, %arg1: i32, %arg2: memref<2xi32, #tpu.memory_space<smem>>) -> (i32, i32) {
    %c0_i32 = arith.constant 0 : i32
    %c0_i32_0 = arith.constant 0 : i32
    %c0_i32_1 = arith.constant 0 : i32
    return %c0_i32, %c0_i32_0 : i32, i32
  }
  func.func @transform_7(%arg0: i32, %arg1: i32, %arg2: memref<2xi32, #tpu.memory_space<smem>>) -> (i32, i32) {
    %c0_i32 = arith.constant 0 : i32
    %c0_i32_0 = arith.constant 0 : i32
    %c0_i32_1 = arith.constant 0 : i32
    return %c0_i32, %c0_i32_0 : i32, i32
  }
  func.func @transform_8(%arg0: i32, %arg1: i32, %arg2: memref<2xi32, #tpu.memory_space<smem>>) -> (i32, i32) {
    %c0_i32 = arith.constant 0 : i32
    %c0_i32_0 = arith.constant 0 : i32
    %c0_i32_1 = arith.constant 0 : i32
    return %c0_i32, %c0_i32_0 : i32, i32
  }
  func.func @transform_9(%arg0: i32, %arg1: i32, %arg2: memref<2xi32, #tpu.memory_space<smem>>) -> (i32, i32) {
    %c0_i32 = arith.constant 0 : i32
    %c0_i32_0 = arith.constant 0 : i32
    %c0_i32_1 = arith.constant 0 : i32
    return %c0_i32, %c0_i32_0 : i32, i32
  }
  func.func @transform_10(%arg0: i32, %arg1: i32, %arg2: memref<2xi32, #tpu.memory_space<smem>>) -> (i32, i32, i32) {
    %c0_i32 = arith.constant 0 : i32
    %c0_i32_0 = arith.constant 0 : i32
    return %arg0, %arg1, %c0_i32 : i32, i32, i32
  }
}

</mosaic_0001>

<llo_original>
// kernel: tpu_custom_call.1
$region0: #{tpu_custom_call.1}
  #allocation0 [shape = 'u32[]', space=smem, size = 0x4, offset = 0x4, fixed_abs, tag = 'smem constant byte address 0x4 - core index']
  #allocation1 [shape = 'u32[144,128]{1,0:T(1,128)}', space=vmem, size = 0x12000, scoped, tag = 'internal scratch']
  #allocation2 [shape = 'f32[16,96]{1,0:T(8,128)}', space=vmem, size = 0x2000, scoped, tag = 'scratch operand']
  #allocation3 [shape = 's32[1]{0}', space=sflag, size = 0x4, scoped, tag = 'scoped memory for tpu_custom_call.1']
  #allocation4 [shape = 'u8[512]{0}', space=smem, size = 0x200, scoped, tag = 'prefetched SMEM operand 0']
  #allocation5 [shape = 'f32[1,1]{1,0:T(1,128)S(1)}', space=vmem, size = 0x200, scoped, tag = 'scoped memory for tpu_custom_call.1']
  %s0 = inlined_call_operand.vmem [shape: s32[2], index: 0, kind: input, shape index: {}]
  %s1 = inlined_call_operand.hbm [shape: f32[2,16,32], index: 1, kind: input, shape index: {}]
  %s2 = inlined_call_operand.hbm [shape: f32[2,16,16], index: 2, kind: input, shape index: {}]
  %s3 = inlined_call_operand.hbm [shape: f32[32,96], index: 3, kind: input, shape index: {}]
  %s4 = inlined_call_operand.vmem [shape: f32[1,96], index: 4, kind: input, shape index: {}]
  %s5 = inlined_call_operand.hbm [shape: f32[1,64], index: 5, kind: input, shape index: {}]
  %s6 = inlined_call_operand.hbm [shape: f32[1,64], index: 6, kind: input, shape index: {}]
  %s7 = inlined_call_operand.hbm [shape: f32[1,64], index: 7, kind: input, shape index: {}]
  %s8 = inlined_call_operand.<no memory space> [shape: f32[1,1], index: 8, kind: input, shape index: {}]
  %s9 = inlined_call_operand.vmem [shape: f32[32,128], index: 9, kind: input, shape index: {}]
  %s10 = inlined_call_operand.vmem [shape: f32[1,128], index: 10, kind: input, shape index: {}]
  %s11 = inlined_call_operand.hbm [shape: f32[2,16,128], index: 11, kind: output, shape index: {}]
  %s12 = sld [smem:[#allocation0]]
  $region101: #{tpu_custom_call.1} parent=0
    _
  %s14 = ssub.s32 1, %s12
  %s15 = scalar_select 0, %s14, %s12
  %s16 = sshll.u32 %s0, 4
  %s17 = int_to_ptr.vmem [resolvable:$true] %s16
  %19 = dma.vmem_to_smem %s17, 16, [#allocation4], [#allocation3]
  %v20 = vstv %s8
  %21 = vst [vmem:[#allocation5] sm:$0x1] %v20
  %22 = dma.done [#allocation3], 16
  %23 = sfence
  $region1: #{tpu_custom_call.1} parent=0
    #allocation6 [shape = 'u8[16384]{0}', space=vmem, size = 0x4000, scoped, tag = 'input window, operand 1']
    #allocation7 [shape = 's32[2]{0}', space=sflag, size = 0x8, scoped, tag = 'scoped memory for tpu_custom_call.1']
    #allocation8 [shape = 's32[2]{0}', space=sflag, size = 0x8, scoped, tag = 'scoped memory for tpu_custom_call.1']
    #allocation9 [shape = 'u8[8192]{0}', space=vmem, size = 0x2000, scoped, tag = 'input window, operand 2']
    #allocation10 [shape = 's32[2]{0}', space=sflag, size = 0x8, scoped, tag = 'scoped memory for tpu_custom_call.1']
    #allocation11 [shape = 'u8[16384]{0}', space=vmem, size = 0x4000, scoped, tag = 'input window, operand 3, single buffered']
    #allocation12 [shape = 'u8[512]{0}', space=vmem, size = 0x400, scoped, tag = 'input window, operand 5, single buffered']
    #allocation13 [shape = 's32[1]{0}', space=sflag, size = 0x4, scoped, tag = 'scoped memory for tpu_custom_call.1']
    #allocation14 [shape = 'u8[512]{0}', space=vmem, size = 0x400, scoped, tag = 'input window, operand 6, single buffered']
    #allocation15 [shape = 'u8[512]{0}', space=vmem, size = 0x400, scoped, tag = 'input window, operand 7, single buffered']
    #allocation16 [shape = 's32[1]{0}', space=sflag, size = 0x4, scoped, tag = 'scoped memory for tpu_custom_call.1']
    #allocation17 [shape = 'u8[8192]{0}', space=vmem, size = 0x2000, scoped, tag = 'output window, operand 0']
    %24 = vsyncpa [#allocation7], 0
    %s25 = scalar_lea.sflag [#allocation7], 1
    %26 = vsyncpa %s25, 0
    %27 = vsyncpa [#allocation10], 0
    %s28 = scalar_lea.sflag [#allocation10], 1
    %29 = vsyncpa %s28, 0
    %30 = vsyncpa [#allocation13], 0
    %31 = vsyncpa [#allocation16], 0
    %32 = vsyncpa [#allocation8], 0
    %s33 = scalar_lea.sflag [#allocation8], 1
    %34 = vsyncpa %s33, 0
    loop: start=0, step=1, limit=6
    $region2: #{tpu_custom_call.1} parent=1 // loop_pre_header
      _
    $region3: #{tpu_custom_call.1} parent=1 // loop_header
      %s36 = sphi 0, %s40
      %p37 = scmp.ge.s32.totalorder %s36, 6
      %s43 = sphi 0, %s55
      %s44 = sphi 0, %s51
      %s45 = sphi 0, %s43
      %s46 = sphi 0, %s44
      %s47 = sphi 0, %s45
      %s48 = sphi 0, %s46
      %s58 = sphi 0, %s60
      %s61 = sphi 0, %s58
      %s62 = sphi 0, %s61
      %s78 = sphi 0, %s62
      %s86 = sphi 0, %s88
      %s89 = sphi 0, %s86
      %s90 = sphi 0, %s89
      %s106 = sphi 0, %s90
      %s110 = sphi 0, %s110
      %s112 = sphi 0, %s110
      %s113 = sphi 0, %s112
      %s127 = sphi 0, %s113
      %s131 = sphi 0, %s131
      %s133 = sphi 0, %s131
      %s134 = sphi 0, %s133
      %s148 = sphi 0, %s134
      %s152 = sphi 0, %s152
      %s154 = sphi 0, %s152
      %s155 = sphi 0, %s154
      %s169 = sphi 0, %s155
      %s173 = sphi 0, %s173
      %s175 = sphi 0, %s173
      %s176 = sphi 0, %s175
      %s190 = sphi 0, %s176
      %s194 = sphi 0, %s194
      %s196 = sphi 0, %s194
      %s197 = sphi 0, %s196
      %s211 = sphi 0, %s197
      %s215 = sphi 0, %s215
      %s217 = sphi 0, %s215
      %s218 = sphi 0, %s217
      %s232 = sphi 0, %s218
      %s236 = sphi 0, %s236
      %s238 = sphi 0, %s236
      %s239 = sphi 0, %s238
      %s253 = sphi 0, %s239
      %s257 = sphi 0, %s257
      %s259 = sphi 0, %s257
      %s260 = sphi 0, %s259
      %s274 = sphi 0, %s260
      %s282 = sphi 0, %s284
      %s285 = sphi 0, %s282
      %s286 = sphi 0, %s285
      %s302 = sphi 0, %s286
    $region4: #{tpu_custom_call.1} parent=1 // loop_header_branch
      %39 = sbr.rel (%p37) target = $region8
    $region5: #{tpu_custom_call.1} parent=1 // loop_body
      %s41 = ssub.s32 %s36, 1
      %s42 = ssub.s32 %s36, 2
      %s49 = sadd.s32 1, %s44
      %p50 = scmp.ge.s32.totalorder %s49, 2
      %s51 = scalar_select %p50, 0, %s49
      %s52 = sadd.s32 1, %s43
      %s53 = scalar_select %p50, %s52, %s43
      %p54 = scmp.ge.s32.totalorder %s53, 2
      %s55 = scalar_select %p54, 0, %s53
      %s56 = ssub.s32 %s43, %s55
      %p57 = scmp.eq.s32.totalorder %s56, 0
      %s59 = sadd.s32 %s58, 1
      %s60 = scalar_select %p57, %s58, %s59
      %p63 = pneg %p57
      %p64 = scmp.eq.s32.totalorder %s36, 3
      %p65 = por %p63, %p64
      %p66 = scmp.ne.s32.totalorder %s58, %s61
      %p67 = scmp.eq.s32.totalorder %s36, 0
      %p68 = por %p66, %p67
      %p69 = scmp.ne.s32.totalorder %s58, %s61
      %p70 = scmp.eq.s32.totalorder %s41, 3
      %p71 = por %p69, %p70
      %p72 = scmp.ne.s32.totalorder %s61, %s62
      %p73 = scmp.eq.s32.totalorder %s41, 0
      %p74 = por %p72, %p73
      %p75 = scmp.ne.s32.totalorder %s61, %s62
      %p76 = scmp.eq.s32.totalorder %s42, 3
      %p77 = por %p75, %p76
      %p79 = scmp.ne.s32.totalorder %s62, %s78
      %p80 = scmp.eq.s32.totalorder %s42, 0
      %p81 = por %p79, %p80
      %s82 = ssub.s32 %s43, %s55
      %s83 = ssub.s32 %s44, %s51
      %s84 = sor.u32 %s82, %s83
      %p85 = scmp.eq.s32.totalorder %s84, 0
      %s87 = sadd.s32 %s86, 1
      %s88 = scalar_select %p85, %s86, %s87
      %p91 = pneg %p85
      %p92 = scmp.eq.s32.totalorder %s36, 3
      %p93 = por %p91, %p92
      %p94 = scmp.ne.s32.totalorder %s86, %s89
      %p95 = scmp.eq.s32.totalorder %s36, 0
      %p96 = por %p94, %p95
      %p97 = scmp.ne.s32.totalorder %s86, %s89
      %p98 = scmp.eq.s32.totalorder %s41, 3
      %p99 = por %p97, %p98
      %p100 = scmp.ne.s32.totalorder %s89, %s90
      %p101 = scmp.eq.s32.totalorder %s41, 0
      %p102 = por %p100, %p101
      %p103 = scmp.ne.s32.totalorder %s89, %s90
      %p104 = scmp.eq.s32.totalorder %s42, 3
      %p105 = por %p103, %p104
      %p107 = scmp.ne.s32.totalorder %s90, %s106
      %p108 = scmp.eq.s32.totalorder %s42, 0
      %p109 = por %p107, %p108
      %s111 = sadd.s32 %s110, 1
      %p114 = scmp.eq.s32.totalorder %s36, 3
      %p115 = scmp.ne.s32.totalorder %s110, %s112
      %p116 = scmp.eq.s32.totalorder %s36, 0
      %p117 = por %p115, %p116
      %p118 = scmp.ne.s32.totalorder %s110, %s112
      %p119 = scmp.eq.s32.totalorder %s41, 3
      %p120 = por %p118, %p119
      %p121 = scmp.ne.s32.totalorder %s112, %s113
      %p122 = scmp.eq.s32.totalorder %s41, 0
      %p123 = por %p121, %p122
      %p124 = scmp.ne.s32.totalorder %s112, %s113
      %p125 = scmp.eq.s32.totalorder %s42, 3
      %p126 = por %p124, %p125
      %p128 = scmp.ne.s32.totalorder %s113, %s127
      %p129 = scmp.eq.s32.totalorder %s42, 0
      %p130 = por %p128, %p129
      %s132 = sadd.s32 %s131, 1
      %p135 = scmp.eq.s32.totalorder %s36, 3
      %p136 = scmp.ne.s32.totalorder %s131, %s133
      %p137 = scmp.eq.s32.totalorder %s36, 0
      %p138 = por %p136, %p137
      %p139 = scmp.ne.s32.totalorder %s131, %s133
      %p140 = scmp.eq.s32.totalorder %s41, 3
      %p141 = por %p139, %p140
      %p142 = scmp.ne.s32.totalorder %s133, %s134
      %p143 = scmp.eq.s32.totalorder %s41, 0
      %p144 = por %p142, %p143
      %p145 = scmp.ne.s32.totalorder %s133, %s134
      %p146 = scmp.eq.s32.totalorder %s42, 3
      %p147 = por %p145, %p146
      %p149 = scmp.ne.s32.totalorder %s134, %s148
      %p150 = scmp.eq.s32.totalorder %s42, 0
      %p151 = por %p149, %p150
      %s153 = sadd.s32 %s152, 1
      %p156 = scmp.eq.s32.totalorder %s36, 3
      %p157 = scmp.ne.s32.totalorder %s152, %s154
      %p158 = scmp.eq.s32.totalorder %s36, 0
      %p159 = por %p157, %p158
      %p160 = scmp.ne.s32.totalorder %s152, %s154
      %p161 = scmp.eq.s32.totalorder %s41, 3
      %p162 = por %p160, %p161
      %p163 = scmp.ne.s32.totalorder %s154, %s155
      %p164 = scmp.eq.s32.totalorder %s41, 0
      %p165 = por %p163, %p164
      %p166 = scmp.ne.s32.totalorder %s154, %s155
      %p167 = scmp.eq.s32.totalorder %s42, 3
      %p168 = por %p166, %p167
      %p170 = scmp.ne.s32.totalorder %s155, %s169
      %p171 = scmp.eq.s32.totalorder %s42, 0
      %p172 = por %p170, %p171
      %s174 = sadd.s32 %s173, 1
      %p177 = scmp.eq.s32.totalorder %s36, 3
      %p178 = scmp.ne.s32.totalorder %s173, %s175
      %p179 = scmp.eq.s32.totalorder %s36, 0
      %p180 = por %p178, %p179
      %p181 = scmp.ne.s32.totalorder %s173, %s175
      %p182 = scmp.eq.s32.totalorder %s41, 3
      %p183 = por %p181, %p182
      %p184 = scmp.ne.s32.totalorder %s175, %s176
      %p185 = scmp.eq.s32.totalorder %s41, 0
      %p186 = por %p184, %p185
      %p187 = scmp.ne.s32.totalorder %s175, %s176
      %p188 = scmp.eq.s32.totalorder %s42, 3
      %p189 = por %p187, %p188
      %p191 = scmp.ne.s32.totalorder %s176, %s190
      %p192 = scmp.eq.s32.totalorder %s42, 0
      %p193 = por %p191, %p192
      %s195 = sadd.s32 %s194, 1
      %p198 = scmp.eq.s32.totalorder %s36, 3
      %p199 = scmp.ne.s32.totalorder %s194, %s196
      %p200 = scmp.eq.s32.totalorder %s36, 0
      %p201 = por %p199, %p200
      %p202 = scmp.ne.s32.totalorder %s194, %s196
      %p203 = scmp.eq.s32.totalorder %s41, 3
      %p204 = por %p202, %p203
      %p205 = scmp.ne.s32.totalorder %s196, %s197
      %p206 = scmp.eq.s32.totalorder %s41, 0
      %p207 = por %p205, %p206
      %p208 = scmp.ne.s32.totalorder %s196, %s197
      %p209 = scmp.eq.s32.totalorder %s42, 3
      %p210 = por %p208, %p209
      %p212 = scmp.ne.s32.totalorder %s197, %s211
      %p213 = scmp.eq.s32.totalorder %s42, 0
      %p214 = por %p212, %p213
      %s216 = sadd.s32 %s215, 1
      %p219 = scmp.eq.s32.totalorder %s36, 3
      %p220 = scmp.ne.s32.totalorder %s215, %s217
      %p221 = scmp.eq.s32.totalorder %s36, 0
      %p222 = por %p220, %p221
      %p223 = scmp.ne.s32.totalorder %s215, %s217
      %p224 = scmp.eq.s32.totalorder %s41, 3
      %p225 = por %p223, %p224
      %p226 = scmp.ne.s32.totalorder %s217, %s218
      %p227 = scmp.eq.s32.totalorder %s41, 0
      %p228 = por %p226, %p227
      %p229 = scmp.ne.s32.totalorder %s217, %s218
      %p230 = scmp.eq.s32.totalorder %s42, 3
      %p231 = por %p229, %p230
      %p233 = scmp.ne.s32.totalorder %s218, %s232
      %p234 = scmp.eq.s32.totalorder %s42, 0
      %p235 = por %p233, %p234
      %s237 = sadd.s32 %s236, 1
      %p240 = scmp.eq.s32.totalorder %s36, 3
      %p241 = scmp.ne.s32.totalorder %s236, %s238
      %p242 = scmp.eq.s32.totalorder %s36, 0
      %p243 = por %p241, %p242
      %p244 = scmp.ne.s32.totalorder %s236, %s238
      %p245 = scmp.eq.s32.totalorder %s41, 3
      %p246 = por %p244, %p245
      %p247 = scmp.ne.s32.totalorder %s238, %s239
      %p248 = scmp.eq.s32.totalorder %s41, 0
      %p249 = por %p247, %p248
      %p250 = scmp.ne.s32.totalorder %s238, %s239
      %p251 = scmp.eq.s32.totalorder %s42, 3
      %p252 = por %p250, %p251
      %p254 = scmp.ne.s32.totalorder %s239, %s253
      %p255 = scmp.eq.s32.totalorder %s42, 0
      %p256 = por %p254, %p255
      %s258 = sadd.s32 %s257, 1
      %p261 = scmp.eq.s32.totalorder %s36, 3
      %p262 = scmp.ne.s32.totalorder %s257, %s259
      %p263 = scmp.eq.s32.totalorder %s36, 0
      %p264 = por %p262, %p263
      %p265 = scmp.ne.s32.totalorder %s257, %s259
      %p266 = scmp.eq.s32.totalorder %s41, 3
      %p267 = por %p265, %p266
      %p268 = scmp.ne.s32.totalorder %s259, %s260
      %p269 = scmp.eq.s32.totalorder %s41, 0
      %p270 = por %p268, %p269
      %p271 = scmp.ne.s32.totalorder %s259, %s260
      %p272 = scmp.eq.s32.totalorder %s42, 3
      %p273 = por %p271, %p272
      %p275 = scmp.ne.s32.totalorder %s260, %s274
      %p276 = scmp.eq.s32.totalorder %s42, 0
      %p277 = por %p275, %p276
      %s278 = ssub.s32 %s43, %s55
      %s279 = ssub.s32 %s44, %s51
      %s280 = sor.u32 %s278, %s279
      %p281 = scmp.eq.s32.totalorder %s280, 0
      %s283 = sadd.s32 %s282, 1
      %s284 = scalar_select %p281, %s282, %s283
      %p287 = pneg %p281
      %p288 = scmp.eq.s32.totalorder %s36, 3
      %p289 = por %p287, %p288
      %p290 = scmp.ne.s32.totalorder %s282, %s285
      %p291 = scmp.eq.s32.totalorder %s36, 0
      %p292 = por %p290, %p291
      %p293 = scmp.ne.s32.totalorder %s282, %s285
      %p294 = scmp.eq.s32.totalorder %s41, 3
      %p295 = por %p293, %p294
      %p296 = scmp.ne.s32.totalorder %s285, %s286
      %p297 = scmp.eq.s32.totalorder %s41, 0
      %p298 = por %p296, %p297
      %p299 = scmp.ne.s32.totalorder %s285, %s286
      %p300 = scmp.eq.s32.totalorder %s42, 3
      %p301 = por %p299, %p300
      %p303 = scmp.ne.s32.totalorder %s286, %s302
      %p304 = scmp.eq.s32.totalorder %s42, 0
      %p305 = por %p303, %p304
      %p306 = scmp.le.s32.totalorder 1, %s36
      %p307 = scmp.lt.s32.totalorder %s36, 5
      %p308 = pnand %p306, %p307
      %p309 = pneg %p308
      // Predicated region
      $region9: #{tpu_custom_call.1} parent=5 // pred_check
        _
      $region10: #{tpu_custom_call.1} parent=5 // pred_check_branch
        %311 = sbr.rel (%p308) target = $region12
      $region11: #{tpu_custom_call.1} parent=5 // pred_region
        %s312 = ssub.s32 %s36, 1
        // Predicated region
        $region13: #{tpu_custom_call.1} parent=11 // pred_check
          %p313 = pneg %p123
        $region14: #{tpu_custom_call.1} parent=11 // pred_check_branch
          %315 = sbr.rel (%p313) target = $region16
        $region15: #{tpu_custom_call.1} parent=11 // pred_region
          %s317 = ssub.s32 512, 512
          %318 = vsyncadd [#allocation10], %s317
          %s319 = sshll.u32 [#allocation11], 4
          %s320 = int_to_ptr.vmem [resolvable:$true] %s319
          %325 = dma.hbm_to_vmem [thread:$0]  %s3, 512, %s320, [#allocation10], 128, 128, 8
        $region16: #{tpu_custom_call.1} parent=11 // pred_fallthru
          _
        // Predicated region
        $region17: #{tpu_custom_call.1} parent=11 // pred_check
          %p326 = pneg %p144
        $region18: #{tpu_custom_call.1} parent=11 // pred_check_branch
          %328 = sbr.rel (%p326) target = $region20
        $region19: #{tpu_custom_call.1} parent=11 // pred_region
          _
        $region20: #{tpu_custom_call.1} parent=11 // pred_fallthru
          _
        // Predicated region
        $region21: #{tpu_custom_call.1} parent=11 // pred_check
          %p329 = pneg %p165
        $region22: #{tpu_custom_call.1} parent=11 // pred_check_branch
          %331 = sbr.rel (%p329) target = $region24
        $region23: #{tpu_custom_call.1} parent=11 // pred_region
          %s333 = ssub.s32 16, 16
          %334 = vsyncadd [#allocation13], %s333
          %s336 = sshll.u32 [#allocation12], 4
          %s337 = int_to_ptr.vmem [resolvable:$true] %s336
          %339 = dma.hbm_to_vmem [thread:$0]  %s5, 16, %s337, [#allocation13]
        $region24: #{tpu_custom_call.1} parent=11 // pred_fallthru
          _
        // Predicated region
        $region25: #{tpu_custom_call.1} parent=11 // pred_check
          %p340 = pneg %p186
        $region26: #{tpu_custom_call.1} parent=11 // pred_check_branch
          %342 = sbr.rel (%p340) target = $region28
        $region27: #{tpu_custom_call.1} parent=11 // pred_region
          %s344 = ssub.s32 16, 16
          %345 = vsyncadd [#allocation13], %s344
          %s347 = sshll.u32 [#allocation14], 4
          %s348 = int_to_ptr.vmem [resolvable:$true] %s347
          %350 = dma.hbm_to_vmem [thread:$0]  %s6, 16, %s348, [#allocation13]
        $region28: #{tpu_custom_call.1} parent=11 // pred_fallthru
          _
        // Predicated region
        $region29: #{tpu_custom_call.1} parent=11 // pred_check
          %p351 = pneg %p207
        $region30: #{tpu_custom_call.1} parent=11 // pred_check_branch
          %353 = sbr.rel (%p351) target = $region32
        $region31: #{tpu_custom_call.1} parent=11 // pred_region
          %s355 = ssub.s32 16, 16
          %356 = vsyncadd [#allocation16], %s355
          %s358 = sshll.u32 [#allocation15], 4
          %s359 = int_to_ptr.vmem [resolvable:$true] %s358
          %361 = dma.hbm_to_vmem [thread:$0]  %s7, 16, %s359, [#allocation16]
        $region32: #{tpu_custom_call.1} parent=11 // pred_fallthru
          _
        // Predicated region
        $region33: #{tpu_custom_call.1} parent=11 // pred_check
          %p362 = pneg %p228
        $region34: #{tpu_custom_call.1} parent=11 // pred_check_branch
          %364 = sbr.rel (%p362) target = $region36
        $region35: #{tpu_custom_call.1} parent=11 // pred_region
          _
        $region36: #{tpu_custom_call.1} parent=11 // pred_fallthru
          _
        // Predicated region
        $region37: #{tpu_custom_call.1} parent=11 // pred_check
          %p365 = pneg %p249
        $region38: #{tpu_custom_call.1} parent=11 // pred_check_branch
          %367 = sbr.rel (%p365) target = $region40
        $region39: #{tpu_custom_call.1} parent=11 // pred_region
          _
        $region40: #{tpu_custom_call.1} parent=11 // pred_fallthru
          _
        // Predicated region
        $region41: #{tpu_custom_call.1} parent=11 // pred_check
          %p368 = pneg %p270
        $region42: #{tpu_custom_call.1} parent=11 // pred_check_branch
          %370 = sbr.rel (%p368) target = $region44
        $region43: #{tpu_custom_call.1} parent=11 // pred_region
          _
        $region44: #{tpu_custom_call.1} parent=11 // pred_fallthru
          _
      $region12: #{tpu_custom_call.1} parent=5 // pred_fallthru
        _
      %p371 = scmp.lt.s32.totalorder %s36, 4
      // Predicated region
      $region45: #{tpu_custom_call.1} parent=5 // pred_check
        %p372 = pneg %p371
      $region46: #{tpu_custom_call.1} parent=5 // pred_check_branch
        %374 = sbr.rel (%p372) target = $region48
      $region47: #{tpu_custom_call.1} parent=5 // pred_region
        // Predicated region
        $region49: #{tpu_custom_call.1} parent=47 // pred_check
          %p375 = pneg %p68
        $region50: #{tpu_custom_call.1} parent=47 // pred_check_branch
          %377 = sbr.rel (%p375) target = $region52
        $region51: #{tpu_custom_call.1} parent=47 // pred_region
          %s378 = sand.u32 %s58, 1
          %s379 = scalar_lea.sflag [#allocation7], %s378
          %s380 = sand.u32 %s58, 1
          %s381 = smul.addr %s380, 16
          %s382 = scalar_lea.vmem [#allocation6], %s381
          %s384 = ssub.s32 256, 256
          %385 = vsyncadd %s379, %s384
          %s386 = smul.addr %s43, 2
          %s387 = smul.addr %s386, 128
          %s388 = scalar_lea.hbm %s1, %s387
          %s389 = sshll.u32 %s382, 4
          %s390 = int_to_ptr.vmem [resolvable:$true] %s389
          %395 = dma.hbm_to_vmem [thread:$0]  %s388, 256, %s390, %s379, 128, 128, 8
        $region52: #{tpu_custom_call.1} parent=47 // pred_fallthru
          _
        // Predicated region
        $region53: #{tpu_custom_call.1} parent=47 // pred_check
          %p396 = pneg %p96
        $region54: #{tpu_custom_call.1} parent=47 // pred_check_branch
          %398 = sbr.rel (%p396) target = $region56
        $region55: #{tpu_custom_call.1} parent=47 // pred_region
          %s399 = sand.u32 %s36, 1
          %s400 = scalar_lea.sflag [#allocation10], %s399
          %s401 = sand.u32 %s86, 1
          %s402 = smul.addr %s401, 8
          %s403 = scalar_lea.vmem [#allocation9], %s402
          %s405 = ssub.s32 128, 128
          %406 = vsyncadd %s400, %s405
          %s407 = smul.addr %s43, 2
          %s408 = sadd.s32 %s44, %s407
          %s409 = smul.addr %s408, 128
          %s410 = scalar_lea.hbm %s2, %s409
          %s412 = sshll.u32 %s403, 4
          %s413 = int_to_ptr.vmem [resolvable:$true] %s412
          %415 = dma.hbm_to_vmem [thread:$0]  %s410, 128, %s413, %s400
        $region56: #{tpu_custom_call.1} parent=47 // pred_fallthru
          _
      $region48: #{tpu_custom_call.1} parent=5 // pred_fallthru
        _
      %p416 = scmp.le.s32.totalorder 1, %s36
      %p417 = scmp.lt.s32.totalorder %s36, 5
      %p418 = pnand %p416, %p417
      %p419 = pneg %p418
      // Predicated region
      $region57: #{tpu_custom_call.1} parent=5 // pred_check
        _
      $region58: #{tpu_custom_call.1} parent=5 // pred_check_branch
        %421 = sbr.rel (%p418) target = $region60
      $region59: #{tpu_custom_call.1} parent=5 // pred_region
        %s422 = ssub.s32 %s36, 1
        %s423 = sand.u32 %s61, 1
        %s424 = scalar_lea.sflag [#allocation7], %s423
        %s425 = sand.u32 %s61, 1
        %s426 = smul.addr %s425, 16
        %s427 = scalar_lea.vmem [#allocation6], %s426
        // Predicated region
        $region61: #{tpu_custom_call.1} parent=59 // pred_check
          %p428 = pneg %p74
        $region62: #{tpu_custom_call.1} parent=59 // pred_check_branch
          %430 = sbr.rel (%p428) target = $region64
        $region63: #{tpu_custom_call.1} parent=59 // pred_region
          %431 = dma.done %s424, 256
        $region64: #{tpu_custom_call.1} parent=59 // pred_fallthru
          _
        %s432 = sand.u32 %s41, 1
        %s433 = scalar_lea.sflag [#allocation10], %s432
        %s434 = sand.u32 %s89, 1
        %s435 = smul.addr %s434, 8
        %s436 = scalar_lea.vmem [#allocation9], %s435
        // Predicated region
        $region65: #{tpu_custom_call.1} parent=59 // pred_check
          %p437 = pneg %p102
        $region66: #{tpu_custom_call.1} parent=59 // pred_check_branch
          %439 = sbr.rel (%p437) target = $region68
        $region67: #{tpu_custom_call.1} parent=59 // pred_region
          %440 = dma.done %s433, 128
        $region68: #{tpu_custom_call.1} parent=59 // pred_fallthru
          _
        // Predicated region
        $region69: #{tpu_custom_call.1} parent=59 // pred_check
          %p441 = pneg %p123
        $region70: #{tpu_custom_call.1} parent=59 // pred_check_branch
          %443 = sbr.rel (%p441) target = $region72
        $region71: #{tpu_custom_call.1} parent=59 // pred_region
          %444 = dma.done [#allocation10], 512
        $region72: #{tpu_custom_call.1} parent=59 // pred_fallthru
          _
        // Predicated region
        $region73: #{tpu_custom_call.1} parent=59 // pred_check
          %p445 = pneg %p165
        $region74: #{tpu_custom_call.1} parent=59 // pred_check_branch
          %447 = sbr.rel (%p445) target = $region76
        $region75: #{tpu_custom_call.1} parent=59 // pred_region
          %448 = dma.done [#allocation13], 16
        $region76: #{tpu_custom_call.1} parent=59 // pred_fallthru
          _
        // Predicated region
        $region77: #{tpu_custom_call.1} parent=59 // pred_check
          %p449 = pneg %p186
        $region78: #{tpu_custom_call.1} parent=59 // pred_check_branch
          %451 = sbr.rel (%p449) target = $region80
        $region79: #{tpu_custom_call.1} parent=59 // pred_region
          %452 = dma.done [#allocation13], 16
        $region80: #{tpu_custom_call.1} parent=59 // pred_fallthru
          _
        // Predicated region
        $region81: #{tpu_custom_call.1} parent=59 // pred_check
          %p453 = pneg %p207
        $region82: #{tpu_custom_call.1} parent=59 // pred_check_branch
          %455 = sbr.rel (%p453) target = $region84
        $region83: #{tpu_custom_call.1} parent=59 // pred_region
          %456 = dma.done [#allocation16], 16
        $region84: #{tpu_custom_call.1} parent=59 // pred_fallthru
          _
        %s457 = sand.u32 %s61, 1
        %s458 = scalar_lea.sflag [#allocation7], %s457
        %s459 = sand.u32 %s61, 1
        %s460 = smul.addr %s459, 16
        %s461 = scalar_lea.vmem [#allocation6], %s460
        %p462 = pneg %p74
        %p463 = pneg %p71
        %s464 = sand.u32 %s41, 1
        %s465 = scalar_lea.sflag [#allocation10], %s464
        %s466 = sand.u32 %s89, 1
        %s467 = smul.addr %s466, 8
        %s468 = scalar_lea.vmem [#allocation9], %s467
        %p469 = pneg %p102
        %p470 = pneg %p99
        %p471 = pneg %p123
        %p472 = pneg %p120
        %p473 = pneg %p144
        %p474 = pneg %p141
        %p475 = pneg %p165
        %p476 = pneg %p162
        %p477 = pneg %p186
        %p478 = pneg %p183
        %p479 = pneg %p207
        %p480 = pneg %p204
        %p481 = pneg %p228
        %p482 = pneg %p225
        %p483 = pneg %p249
        %p484 = pneg %p246
        %p485 = pneg %p270
        %p486 = pneg %p267
        %p487 = pneg %p298
        %p488 = pneg %p295
        %s489 = sand.u32 %s285, 1
        %s490 = scalar_lea.sflag [#allocation8], %s489
        %s491 = sand.u32 %s285, 1
        %s492 = smul.addr %s491, 8
        %s493 = scalar_lea.vmem [#allocation17], %s492
        %p494 = scmp.eq.s32.totalorder %s46, 0
        // Predicated region
        $region85: #{tpu_custom_call.1} parent=59 // pred_check
          %p495 = pneg %p494
        $region86: #{tpu_custom_call.1} parent=59 // pred_check_branch
          %497 = sbr.rel (%p495) target = $region88
        $region87: #{tpu_custom_call.1} parent=59 // pred_region
          %v498 = vld [vmem:[%s427] sm:$0xff]
          %v499 = vld [vmem:[%s427 + $0x8] sm:$0xff]
          %v500 = vld [vmem:[#allocation11] sm:$0xff]
          %v501 = vld [vmem:[#allocation11 + $0x8] sm:$0xff]
          %v502 = vld [vmem:[#allocation11 + $0x10] sm:$0xff]
          %v503 = vld [vmem:[#allocation11 + $0x18] sm:$0xff]
          %v504 = vld [vmem:[%s4] sm:$0x1]
          %v506 = vlaneseq
          %v507 = vshrl.u32 %v506, 7
          %v508 = vsub.s32 0, %v507
          %v509 = vrot.slane %v504, %v508
          %vm511 = vcmask 261120
          %v513 = vsel %vm511, %v498, 0
          %v516 = vsel %vm511, %v499, 0
          %518 = vmatprep.subr.mxu0 0.0
          %519 = vmatpush1.msra.mxu0 %v500
          %520 = vmatprep.subr.mxu0 0.0
          %521 = vmatpush1.msra.mxu0 %v501
          %522 = vmatprep.subr.mxu0 0.0
          %523 = vmatpush1.msra.mxu0 %v502
          %524 = vmatprep.subr.mxu0 0.0
          %525 = vmatpush1.msra.mxu0 %v503
          %526 = vmatprep.subr.mxu0 0.0
          %527 = vmatpush1.msra.mxu0 0.0
          %528 = vmatprep.subr.mxu0 0.0
          %529 = vmatpush1.msra.mxu0 0.0
          %530 = vmatprep.subr.mxu0 0.0
          %531 = vmatpush1.msra.mxu0 0.0
          %532 = vmatprep.subr.mxu0 0.0
          %533 = vmatpush1.msra.mxu0 0.0
          %534 = vmatprep.subr.mxu0 0.0
          %535 = vmatpush1.msra.mxu0 0.0
          %536 = vmatprep.subr.mxu0 0.0
          %537 = vmatpush1.msra.mxu0 0.0
          %538 = vmatprep.subr.mxu0 0.0
          %539 = vmatpush1.msra.mxu0 0.0
          %540 = vmatprep.subr.mxu0 0.0
          %541 = vmatpush1.msra.mxu0 0.0
          %542 = vmatprep.subr.mxu0 0.0
          %543 = vmatpush1.msra.mxu0 0.0
          %544 = vmatprep.subr.mxu0 0.0
          %545 = vmatpush1.msra.mxu0 0.0
          %546 = vmatprep.subr.mxu0 0.0
          %547 = vmatpush1.msra.mxu0 0.0
          %548 = vmatprep.subr.mxu0 0.0
          %549 = vmatpush1.msra.mxu0 0.0
          %550 = vmatprep.subr.mxu0 0.0
          %551 = vmatpush1.msra.mxu0 0.0
          %552 = vmatprep.subr.mxu0 0.0
          %553 = vmatpush1.msra.mxu0 0.0
          %554 = vmatprep.subr.mxu0 0.0
          %555 = vmatpush1.msra.mxu0 0.0
          %556 = vmatprep.subr.mxu0 0.0
          %557 = vmatpush1.msra.mxu0 0.0
          %558 = vmatprep.subr.mxu0 0.0
          %559 = vmatpush1.msra.mxu0 0.0
          %560 = vmatprep.subr.mxu0 0.0
          %561 = vmatpush1.msra.mxu0 0.0
          %562 = vmatprep.subr.mxu0 0.0
          %563 = vmatpush1.msra.mxu0 0.0
          %564 = vmatprep.subr.mxu0 0.0
          %565 = vmatpush1.msra.mxu0 0.0
          %566 = vmatprep.subr.mxu0 0.0
          %567 = vmatpush1.msra.mxu0 0.0
          %568 = vmatprep.subr.mxu0 0.0
          %569 = vmatpush1.msra.mxu0 0.0
          %570 = vmatprep.subr.mxu0 0.0
          %571 = vmatpush1.msra.mxu0 0.0
          %572 = vmatprep.subr.mxu0 0.0
          %573 = vmatpush1.msra.mxu0 0.0
          %574 = vmatprep.subr.mxu0 0.0
          %575 = vmatpush1.msra.mxu0 0.0
          %576 = vmatprep.subr.mxu0 0.0
          %577 = vmatpush1.msra.mxu0 0.0
          %578 = vmatprep.subr.mxu0 0.0
          %579 = vmatpush1.msra.mxu0 0.0
          %580 = vmatprep.subr.mxu0 0.0
          %581 = vmatpush1.msra.mxu0 0.0
          %582 = vmatprep.mubr.f32.mxu0 0.0
          %583 = vmatmul.mubr.f32.gmra.mrb[0].mxu0 %v513
          %v584 = vpop.f32.mrb[0].mxu0
          %v585 = vadd.f32 %v509, %v584
          %v586 = vpop.f32.mrb[0].mxu0
          %587 = vmatprep.mubr.f32.mxu0 0.0
          %588 = vmatmul.mubr.f32.gmra.mrb[0].mxu0 %v516
          %v589 = vpop.f32.mrb[0].mxu0
          %v590 = vadd.f32 %v509, %v589
          %v591 = vpop.f32.mrb[0].mxu0
          %592 = vdwg.mxu0
          %vm593 = vcmask 785408
          %594 = vst.msk [vmem:[#allocation2] sm:$0xff] %vm593, %v585
          %595 = vst.msk [vmem:[#allocation2 + $0x8] sm:$0xff] %vm593, %v590
        $region88: #{tpu_custom_call.1} parent=59 // pred_fallthru
          _
        %s596 = smul.u32 %s46, 8
        %s597 = scalar_lea.vmem [#allocation2], %s596
        %v598 = vld [vmem:[%s597] sm:$0xff]
        %v599 = vld [vmem:[#allocation2] sm:$0xff]
        %v600 = vld [vmem:[#allocation2 + $0x8] sm:$0xff]
        %v601 = vld [vmem:[%s436] sm:$0xff]
        %v602 = vadd.f32 %v601, 2.7182817
        %v603 = vlog2.pop %v602
        %v604 = vmul.f32 %v603, 0.6931472
        %v605 = vrcp.pop %v604
        %v606 = vmul.f32 1.0, %v605
        %v607 = vlaneseq
        %v608 = vshrl.u32 %v607, 7
        %v609 = vsub.s32 0, %v608
        %v610 = vrot.slane %v606, %v609
        %612 = vbcast.lane.b32.xlu0 %v610, 256
        %v613 = vpop.permute.xlu0 %612
        %s615 = sor.u32 256, 8
        %616 = vbcast.lane.b32.xlu0 %v610, %s615
        %v617 = vpop.permute.xlu0 %616
        %v618 = vlaneseq
        %v619 = vshrl.u32 %v618, 7
        %v620 = vsub.s32 1, %v619
        %v621 = vrot.slane %v606, %v620
        %623 = vbcast.lane.b32.xlu0 %v621, 256
        %v624 = vpop.permute.xlu0 %623
        %s626 = sor.u32 256, 8
        %627 = vbcast.lane.b32.xlu0 %v621, %s626
        %v628 = vpop.permute.xlu0 %627
        %v629 = vlaneseq
        %v630 = vshrl.u32 %v629, 7
        %v631 = vsub.s32 2, %v630
        %v632 = vrot.slane %v606, %v631
        %634 = vbcast.lane.b32.xlu0 %v632, 256
        %v635 = vpop.permute.xlu0 %634
        %s637 = sor.u32 256, 8
        %638 = vbcast.lane.b32.xlu0 %v632, %s637
        %v639 = vpop.permute.xlu0 %638
        %v640 = vlaneseq
        %v641 = vshrl.u32 %v640, 7
        %v642 = vsub.s32 3, %v641
        %v643 = vrot.slane %v606, %v642
        %645 = vbcast.lane.b32.xlu0 %v643, 256
        %v646 = vpop.permute.xlu0 %645
        %s648 = sor.u32 256, 8
        %649 = vbcast.lane.b32.xlu0 %v643, %s648
        %v650 = vpop.permute.xlu0 %649
        %v651 = vlaneseq
        %v652 = vshrl.u32 %v651, 7
        %v653 = vsub.s32 4, %v652
        %v654 = vrot.slane %v606, %v653
        %656 = vbcast.lane.b32.xlu0 %v654, 256
        %v657 = vpop.permute.xlu0 %656
        %s659 = sor.u32 256, 8
        %660 = vbcast.lane.b32.xlu0 %v654, %s659
        %v661 = vpop.permute.xlu0 %660
        %v662 = vlaneseq
        %v663 = vshrl.u32 %v662, 7
        %v664 = vsub.s32 5, %v663
        %v665 = vrot.slane %v606, %v664
        %667 = vbcast.lane.b32.xlu0 %v665, 256
        %v668 = vpop.permute.xlu0 %667
        %s670 = sor.u32 256, 8
        %671 = vbcast.lane.b32.xlu0 %v665, %s670
        %v672 = vpop.permute.xlu0 %671
        %v673 = vlaneseq
        %v674 = vshrl.u32 %v673, 7
        %v675 = vsub.s32 6, %v674
        %v676 = vrot.slane %v606, %v675
        %678 = vbcast.lane.b32.xlu0 %v676, 256
        %v679 = vpop.permute.xlu0 %678
        %s681 = sor.u32 256, 8
        %682 = vbcast.lane.b32.xlu0 %v676, %s681
        %v683 = vpop.permute.xlu0 %682
        %v684 = vlaneseq
        %v685 = vshrl.u32 %v684, 7
        %v686 = vsub.s32 7, %v685
        %v687 = vrot.slane %v606, %v686
        %689 = vbcast.lane.b32.xlu0 %v687, 256
        %v690 = vpop.permute.xlu0 %689
        %s692 = sor.u32 256, 8
        %693 = vbcast.lane.b32.xlu0 %v687, %s692
        %v694 = vpop.permute.xlu0 %693
        %v695 = vld [vmem:[#allocation12] sm:$0x1]
        %v697 = vlaneseq
        %v698 = vshrl.u32 %v697, 7
        %v699 = vsub.s32 0, %v698
        %v700 = vrot.slane %v695, %v699
        %v702 = vmul.f32 %v613, %v700
        %v703 = vmul.f32 %v617, %v700
        %v704 = vmul.f32 %v624, %v700
        %v705 = vmul.f32 %v628, %v700
        %v706 = vmul.f32 %v635, %v700
        %v707 = vmul.f32 %v639, %v700
        %v708 = vmul.f32 %v646, %v700
        %v709 = vmul.f32 %v650, %v700
        %v710 = vmul.f32 %v657, %v700
        %v711 = vmul.f32 %v661, %v700
        %v712 = vmul.f32 %v668, %v700
        %v713 = vmul.f32 %v672, %v700
        %v714 = vmul.f32 %v679, %v700
        %v715 = vmul.f32 %v683, %v700
        %v716 = vmul.f32 %v690, %v700
        %v717 = vmul.f32 %v694, %v700
        %v718 = vld [vmem:[#allocation14] sm:$0x1]
        %v720 = vlaneseq
        %v721 = vshrl.u32 %v720, 7
        %v722 = vsub.s32 0, %v721
        %v723 = vrot.slane %v718, %v722
        %v725 = vadd.f32 %v702, %v723
        %v726 = vadd.f32 %v703, %v723
        %v727 = vadd.f32 %v704, %v723
        %v728 = vadd.f32 %v705, %v723
        %v729 = vadd.f32 %v706, %v723
        %v730 = vadd.f32 %v707, %v723
        %v731 = vadd.f32 %v708, %v723
        %v732 = vadd.f32 %v709, %v723
        %v733 = vadd.f32 %v710, %v723
        %v734 = vadd.f32 %v711, %v723
        %v735 = vadd.f32 %v712, %v723
        %v736 = vadd.f32 %v713, %v723
        %v737 = vadd.f32 %v714, %v723
        %v738 = vadd.f32 %v715, %v723
        %v739 = vadd.f32 %v716, %v723
        %v740 = vadd.f32 %v717, %v723
        %vm741 = vcmp.ge.f32.partialorder %v725, 0.0
        %vm742 = vcmp.ge.f32.partialorder %v726, 0.0
        %vm743 = vcmp.ge.f32.partialorder %v727, 0.0
        %vm744 = vcmp.ge.f32.partialorder %v728, 0.0
        %vm745 = vcmp.ge.f32.partialorder %v729, 0.0
        %vm746 = vcmp.ge.f32.partialorder %v730, 0.0
        %vm747 = vcmp.ge.f32.partialorder %v731, 0.0
        %vm748 = vcmp.ge.f32.partialorder %v732, 0.0
        %vm749 = vcmp.ge.f32.partialorder %v733, 0.0
        %vm750 = vcmp.ge.f32.partialorder %v734, 0.0
        %vm751 = vcmp.ge.f32.partialorder %v735, 0.0
        %vm752 = vcmp.ge.f32.partialorder %v736, 0.0
        %vm753 = vcmp.ge.f32.partialorder %v737, 0.0
        %vm754 = vcmp.ge.f32.partialorder %v738, 0.0
        %vm755 = vcmp.ge.f32.partialorder %v739, 0.0
        %vm756 = vcmp.ge.f32.partialorder %v740, 0.0
        %v757 = vmul.f32 %v725, 0.2
        %v758 = vmul.f32 %v726, 0.2
        %v759 = vmul.f32 %v727, 0.2
        %v760 = vmul.f32 %v728, 0.2
        %v761 = vmul.f32 %v729, 0.2
        %v762 = vmul.f32 %v730, 0.2
        %v763 = vmul.f32 %v731, 0.2
        %v764 = vmul.f32 %v732, 0.2
        %v765 = vmul.f32 %v733, 0.2
        %v766 = vmul.f32 %v734, 0.2
        %v767 = vmul.f32 %v735, 0.2
        %v768 = vmul.f32 %v736, 0.2
        %v769 = vmul.f32 %v737, 0.2
        %v770 = vmul.f32 %v738, 0.2
        %v771 = vmul.f32 %v739, 0.2
        %v772 = vmul.f32 %v740, 0.2
        %v773 = vsel %vm741, %v725, %v757
        %v774 = vsel %vm742, %v726, %v758
        %v775 = vsel %vm743, %v727, %v759
        %v776 = vsel %vm744, %v728, %v760
        %v777 = vsel %vm745, %v729, %v761
        %v778 = vsel %vm746, %v730, %v762
        %v779 = vsel %vm747, %v731, %v763
        %v780 = vsel %vm748, %v732, %v764
        %v781 = vsel %vm749, %v733, %v765
        %v782 = vsel %vm750, %v734, %v766
        %v783 = vsel %vm751, %v735, %v767
        %v784 = vsel %vm752, %v736, %v768
        %v785 = vsel %vm753, %v737, %v769
        %v786 = vsel %vm754, %v738, %v770
        %v787 = vsel %vm755, %v739, %v771
        %v788 = vsel %vm756, %v740, %v772
        %v789 = vld [vmem:[#allocation15] sm:$0x1]
        %v791 = vlaneseq
        %v792 = vshrl.u32 %v791, 7
        %v793 = vsub.s32 0, %v792
        %v794 = vrot.slane %v789, %v793
        %v796 = vmul.f32 %v773, %v794
        %v797 = vmul.f32 %v774, %v794
        %v798 = vmul.f32 %v775, %v794
        %v799 = vmul.f32 %v776, %v794
        %v800 = vmul.f32 %v777, %v794
        %v801 = vmul.f32 %v778, %v794
        %v802 = vmul.f32 %v779, %v794
        %v803 = vmul.f32 %v780, %v794
        %v804 = vmul.f32 %v781, %v794
        %v805 = vmul.f32 %v782, %v794
        %v806 = vmul.f32 %v783, %v794
        %v807 = vmul.f32 %v784, %v794
        %v808 = vmul.f32 %v785, %v794
        %v809 = vmul.f32 %v786, %v794
        %v810 = vmul.f32 %v787, %v794
        %v811 = vmul.f32 %v788, %v794
        %vm812 = vcmask 523264
        %v813 = vsel %vm812, %v796, 0.0
        %814 = vadd.xlane.f32.xlu0 %v813
        %v815 = vpop.xlane.xlu0 %814
        %v816 = vsel %vm812, %v797, 0.0
        %817 = vadd.xlane.f32.xlu0 %v816
        %v818 = vpop.xlane.xlu0 %817
        %v819 = vsel %vm812, %v798, 0.0
        %820 = vadd.xlane.f32.xlu0 %v819
        %v821 = vpop.xlane.xlu0 %820
        %v822 = vsel %vm812, %v799, 0.0
        %823 = vadd.xlane.f32.xlu0 %v822
        %v824 = vpop.xlane.xlu0 %823
        %v825 = vsel %vm812, %v800, 0.0
        %826 = vadd.xlane.f32.xlu0 %v825
        %v827 = vpop.xlane.xlu0 %826
        %v828 = vsel %vm812, %v801, 0.0
        %829 = vadd.xlane.f32.xlu0 %v828
        %v830 = vpop.xlane.xlu0 %829
        %v831 = vsel %vm812, %v802, 0.0
        %832 = vadd.xlane.f32.xlu0 %v831
        %v833 = vpop.xlane.xlu0 %832
        %v834 = vsel %vm812, %v803, 0.0
        %835 = vadd.xlane.f32.xlu0 %v834
        %v836 = vpop.xlane.xlu0 %835
        %v837 = vsel %vm812, %v804, 0.0
        %838 = vadd.xlane.f32.xlu0 %v837
        %v839 = vpop.xlane.xlu0 %838
        %v840 = vsel %vm812, %v805, 0.0
        %841 = vadd.xlane.f32.xlu0 %v840
        %v842 = vpop.xlane.xlu0 %841
        %v843 = vsel %vm812, %v806, 0.0
        %844 = vadd.xlane.f32.xlu0 %v843
        %v845 = vpop.xlane.xlu0 %844
        %v846 = vsel %vm812, %v807, 0.0
        %847 = vadd.xlane.f32.xlu0 %v846
        %v848 = vpop.xlane.xlu0 %847
        %v849 = vsel %vm812, %v808, 0.0
        %850 = vadd.xlane.f32.xlu0 %v849
        %v851 = vpop.xlane.xlu0 %850
        %v852 = vsel %vm812, %v809, 0.0
        %853 = vadd.xlane.f32.xlu0 %v852
        %v854 = vpop.xlane.xlu0 %853
        %v855 = vsel %vm812, %v810, 0.0
        %856 = vadd.xlane.f32.xlu0 %v855
        %v857 = vpop.xlane.xlu0 %856
        %v858 = vsel %vm812, %v811, 0.0
        %859 = vadd.xlane.f32.xlu0 %v858
        %v860 = vpop.xlane.xlu0 %859
        %v861 = vld [vmem:[#allocation5] sm:$0x1]
        %v863 = vlaneseq
        %v864 = vshrl.u32 %v863, 7
        %v865 = vsub.s32 0, %v864
        %v866 = vrot.slane %v861, %v865
        %867 = vset.pattern.permute.xlu0 0
        %868 = vperm.xlu0 %867, %v866
        %v869 = vpop.permute.xlu0 %868
        %v871 = vadd.f32 %v815, %v869
        %v872 = vadd.f32 %v818, %v869
        %v873 = vadd.f32 %v821, %v869
        %v874 = vadd.f32 %v824, %v869
        %v875 = vadd.f32 %v827, %v869
        %v876 = vadd.f32 %v830, %v869
        %v877 = vadd.f32 %v833, %v869
        %v878 = vadd.f32 %v836, %v869
        %v879 = vadd.f32 %v839, %v869
        %v880 = vadd.f32 %v842, %v869
        %v881 = vadd.f32 %v845, %v869
        %v882 = vadd.f32 %v848, %v869
        %v883 = vadd.f32 %v851, %v869
        %v884 = vadd.f32 %v854, %v869
        %v885 = vadd.f32 %v857, %v869
        %v886 = vadd.f32 %v860, %v869
        %s887 = sld [smem:[#allocation4 + %s45]]
        %v888 = vlaneseq
        %v889 = vshrl.u32 %v888, 7
        %v890 = vstv %s596
        %v891 = vadd.s32 %v890, %v889
        %v892 = vlaneseq
        %v893 = vand.u32 %v892, 127
        %vm894 = vcmp.le.s32.totalorder %v893, %v891
        %vm895 = vcmp.eq.s32.totalorder %v891, 0
        %vm896 = vmor %vm894, %vm895
        %v897 = vstv %s887
        %vm898 = vcmp.lt.s32.totalorder %v893, %v897
        %vm899 = vmand %vm898, %vm896
        %902 = vrot.lane.b32.xlu0 %v599, 96
        %v903 = vpop.permute.xlu0 %902
        %904 = vrot.lane.b32.xlu0 %v600, 96
        %v905 = vpop.permute.xlu0 %904
        %vm906 = vcmask 64512
        %v908 = vsel %vm906, %v598, 0
        %v910 = vsel %vm906, %v903, 0
        %v912 = vsel %vm906, %v905, 0
        %914 = vmatprep.subr.mxu0 0.0
        %915 = vmatpush1.xpose.msra.mxu0 %v910
        %916 = vmatprep.subr.mxu0 0.0
        %917 = vmatpush1.xpose.msra.mxu0 %v912
        %918 = vmatprep.subr.mxu0 0.0
        %919 = vmatpush1.xpose.msra.mxu0 0.0
        %920 = vmatprep.subr.mxu0 0.0
        %921 = vmatpush1.xpose.msra.mxu0 0.0
        %922 = vmatprep.subr.mxu0 0.0
        %923 = vmatpush1.xpose.msra.mxu0 0.0
        %924 = vmatprep.subr.mxu0 0.0
        %925 = vmatpush1.xpose.msra.mxu0 0.0
        %926 = vmatprep.subr.mxu0 0.0
        %927 = vmatpush1.xpose.msra.mxu0 0.0
        %928 = vmatprep.subr.mxu0 0.0
        %929 = vmatpush1.xpose.msra.mxu0 0.0
        %930 = vmatprep.subr.mxu0 0.0
        %931 = vmatpush1.xpose.msra.mxu0 0.0
        %932 = vmatprep.subr.mxu0 0.0
        %933 = vmatpush1.xpose.msra.mxu0 0.0
        %934 = vmatprep.subr.mxu0 0.0
        %935 = vmatpush1.xpose.msra.mxu0 0.0
        %936 = vmatprep.subr.mxu0 0.0
        %937 = vmatpush1.xpose.msra.mxu0 0.0
        %938 = vmatprep.subr.mxu0 0.0
        %939 = vmatpush1.xpose.msra.mxu0 0.0
        %940 = vmatprep.subr.mxu0 0.0
        %941 = vmatpush1.xpose.msra.mxu0 0.0
        %942 = vmatprep.subr.mxu0 0.0
        %943 = vmatpush1.xpose.msra.mxu0 0.0
        %944 = vmatprep.subr.mxu0 0.0
        %945 = vmatpush1.xpose.msra.mxu0 0.0
        %946 = vmatprep.subr.mxu0 0.0
        %947 = vmatpush1.xpose.msra.mxu0 0.0
        %948 = vmatprep.subr.mxu0 0.0
        %949 = vmatpush1.xpose.msra.mxu0 0.0
        %950 = vmatprep.subr.mxu0 0.0
        %951 = vmatpush1.xpose.msra.mxu0 0.0
        %952 = vmatprep.subr.mxu0 0.0
        %953 = vmatpush1.xpose.msra.mxu0 0.0
        %954 = vmatprep.subr.mxu0 0.0
        %955 = vmatpush1.xpose.msra.mxu0 0.0
        %956 = vmatprep.subr.mxu0 0.0
        %957 = vmatpush1.xpose.msra.mxu0 0.0
        %958 = vmatprep.subr.mxu0 0.0
        %959 = vmatpush1.xpose.msra.mxu0 0.0
        %960 = vmatprep.subr.mxu0 0.0
        %961 = vmatpush1.xpose.msra.mxu0 0.0
        %962 = vmatprep.subr.mxu0 0.0
        %963 = vmatpush1.xpose.msra.mxu0 0.0
        %964 = vmatprep.subr.mxu0 0.0
        %965 = vmatpush1.xpose.msra.mxu0 0.0
        %966 = vmatprep.subr.mxu0 0.0
        %967 = vmatpush1.xpose.msra.mxu0 0.0
        %968 = vmatprep.subr.mxu0 0.0
        %969 = vmatpush1.xpose.msra.mxu0 0.0
        %970 = vmatprep.subr.mxu0 0.0
        %971 = vmatpush1.xpose.msra.mxu0 0.0
        %972 = vmatprep.subr.mxu0 0.0
        %973 = vmatpush1.xpose.msra.mxu0 0.0
        %974 = vmatprep.subr.mxu0 0.0
        %975 = vmatpush1.xpose.msra.mxu0 0.0
        %976 = vmatprep.subr.mxu0 0.0
        %977 = vmatpush1.xpose.msra.mxu0 0.0
        %978 = vmatprep.mubr.f32.mxu0 0.0
        %979 = vmatmul.mubr.f32.gmra.mrb[0].mxu0 %v908
        %v980 = vpop.f32.mrb[0].mxu0
        %v981 = vadd.f32 0.0, %v980
        %v982 = vpop.f32.mrb[0].mxu0
        %983 = vdwg.mxu0
        %v984 = vmul.f32 %v981, 0.35355338
        %v1001 = vlaneseq
        %v1002 = vshrl.u32 %v1001, 7
        %v1003 = vsub.s32 %v893, %v1002
        %v1004 = vrot.slane %v871, %v1003
        %v1005 = vadd.s32 %v893, 4294967288
        %v1006 = vlaneseq
        %v1007 = vshrl.u32 %v1006, 7
        %v1008 = vsub.s32 %v1005, %v1007
        %v1009 = vrot.slane %v872, %v1008
        %vm1010 = vcmask 130112
        %v1011 = vsel %vm1010, %v1009, %v1004
        %v1012 = vlaneseq
        %v1013 = vshrl.u32 %v1012, 7
        %v1014 = vsub.s32 %v893, %v1013
        %v1015 = vrot.slane %v873, %v1014
        %v1016 = vlaneseq
        %v1017 = vshrl.u32 %v1016, 7
        %v1018 = vsub.s32 %v1005, %v1017
        %v1019 = vrot.slane %v874, %v1018
        %v1020 = vsel %vm1010, %v1019, %v1015
        %v1021 = vlaneseq
        %v1022 = vshrl.u32 %v1021, 7
        %v1023 = vsub.s32 %v893, %v1022
        %v1024 = vrot.slane %v875, %v1023
        %v1025 = vlaneseq
        %v1026 = vshrl.u32 %v1025, 7
        %v1027 = vsub.s32 %v1005, %v1026
        %v1028 = vrot.slane %v876, %v1027
        %v1029 = vsel %vm1010, %v1028, %v1024
        %v1030 = vlaneseq
        %v1031 = vshrl.u32 %v1030, 7
        %v1032 = vsub.s32 %v893, %v1031
        %v1033 = vrot.slane %v877, %v1032
        %v1034 = vlaneseq
        %v1035 = vshrl.u32 %v1034, 7
        %v1036 = vsub.s32 %v1005, %v1035
        %v1037 = vrot.slane %v878, %v1036
        %v1038 = vsel %vm1010, %v1037, %v1033
        %v1039 = vlaneseq
        %v1040 = vshrl.u32 %v1039, 7
        %v1041 = vsub.s32 %v893, %v1040
        %v1042 = vrot.slane %v879, %v1041
        %v1043 = vlaneseq
        %v1044 = vshrl.u32 %v1043, 7
        %v1045 = vsub.s32 %v1005, %v1044
        %v1046 = vrot.slane %v880, %v1045
        %v1047 = vsel %vm1010, %v1046, %v1042
        %v1048 = vlaneseq
        %v1049 = vshrl.u32 %v1048, 7
        %v1050 = vsub.s32 %v893, %v1049
        %v1051 = vrot.slane %v881, %v1050
        %v1052 = vlaneseq
        %v1053 = vshrl.u32 %v1052, 7
        %v1054 = vsub.s32 %v1005, %v1053
        %v1055 = vrot.slane %v882, %v1054
        %v1056 = vsel %vm1010, %v1055, %v1051
        %v1057 = vlaneseq
        %v1058 = vshrl.u32 %v1057, 7
        %v1059 = vsub.s32 %v893, %v1058
        %v1060 = vrot.slane %v883, %v1059
        %v1061 = vlaneseq
        %v1062 = vshrl.u32 %v1061, 7
        %v1063 = vsub.s32 %v1005, %v1062
        %v1064 = vrot.slane %v884, %v1063
        %v1065 = vsel %vm1010, %v1064, %v1060
        %v1066 = vlaneseq
        %v1067 = vshrl.u32 %v1066, 7
        %v1068 = vsub.s32 %v893, %v1067
        %v1069 = vrot.slane %v885, %v1068
        %v1070 = vlaneseq
        %v1071 = vshrl.u32 %v1070, 7
        %v1072 = vsub.s32 %v1005, %v1071
        %v1073 = vrot.slane %v886, %v1072
        %v1074 = vsel %vm1010, %v1073, %v1069
        %vm1075 = vcmask 1041409
        %v1076 = vsel %vm1075, %v1020, %v1011
        %vm1077 = vcmask 1042434
        %v1078 = vsel %vm1077, %v1029, %v1076
        %vm1079 = vcmask 1043459
        %v1080 = vsel %vm1079, %v1038, %v1078
        %vm1081 = vcmask 1044484
        %v1082 = vsel %vm1081, %v1047, %v1080
        %vm1083 = vcmask 1045509
        %v1084 = vsel %vm1083, %v1056, %v1082
        %vm1085 = vcmask 1046534
        %v1086 = vsel %vm1085, %v1065, %v1084
        %vm1087 = vcmask 1047559
        %v1088 = vsel %vm1087, %v1074, %v1086
        %v1090 = vadd.f32 %v984, %v1088
        %v1091 = vsel %vm899, %v1090, -1e+30
        %vm1092 = vcmask 130048
        %v1093 = vsel %vm1092, %v1091, -inf
        %1094 = vmax.xlane.f32.xlu0 %v1093
        %v1095 = vpop.xlane.xlu0 %1094
        %v1096 = vsub.f32 %v1091, %v1095
        %v1097 = vmul.f32 %v1096, 1.442695
        %v1098 = vpow.pop %v1097
        %v1099 = vsel %vm1092, %v1098, 0.0
        %1100 = vadd.xlane.f32.xlu0 %v1099
        %v1101 = vpop.xlane.xlu0 %1100
        %1102 = vrot.lane.b32.xlu0 %v599, 64
        %v1103 = vpop.permute.xlu0 %1102
        %1104 = vrot.lane.b32.xlu0 %v600, 64
        %v1105 = vpop.permute.xlu0 %1104
        %v1109 = vsel %vm1092, %v1098, 0
        %1111 = vmatprep.subr.mxu0 0.0
        %1112 = vmatpush1.msra.mxu0 %v1103
        %1113 = vmatprep.subr.mxu0 0.0
        %1114 = vmatpush1.msra.mxu0 %v1105
        %1115 = vmatprep.subr.mxu0 0.0
        %1116 = vmatpush1.msra.mxu0 0.0
        %1117 = vmatprep.subr.mxu0 0.0
        %1118 = vmatpush1.msra.mxu0 0.0
        %1119 = vmatprep.subr.mxu0 0.0
        %1120 = vmatpush1.msra.mxu0 0.0
        %1121 = vmatprep.subr.mxu0 0.0
        %1122 = vmatpush1.msra.mxu0 0.0
        %1123 = vmatprep.subr.mxu0 0.0
        %1124 = vmatpush1.msra.mxu0 0.0
        %1125 = vmatprep.subr.mxu0 0.0
        %1126 = vmatpush1.msra.mxu0 0.0
        %1127 = vmatprep.subr.mxu0 0.0
        %1128 = vmatpush1.msra.mxu0 0.0
        %1129 = vmatprep.subr.mxu0 0.0
        %1130 = vmatpush1.msra.mxu0 0.0
        %1131 = vmatprep.subr.mxu0 0.0
        %1132 = vmatpush1.msra.mxu0 0.0
        %1133 = vmatprep.subr.mxu0 0.0
        %1134 = vmatpush1.msra.mxu0 0.0
        %1135 = vmatprep.subr.mxu0 0.0
        %1136 = vmatpush1.msra.mxu0 0.0
        %1137 = vmatprep.subr.mxu0 0.0
        %1138 = vmatpush1.msra.mxu0 0.0
        %1139 = vmatprep.subr.mxu0 0.0
        %1140 = vmatpush1.msra.mxu0 0.0
        %1141 = vmatprep.subr.mxu0 0.0
        %1142 = vmatpush1.msra.mxu0 0.0
        %1143 = vmatprep.subr.mxu0 0.0
        %1144 = vmatpush1.msra.mxu0 0.0
        %1145 = vmatprep.subr.mxu0 0.0
        %1146 = vmatpush1.msra.mxu0 0.0
        %1147 = vmatprep.subr.mxu0 0.0
        %1148 = vmatpush1.msra.mxu0 0.0
        %1149 = vmatprep.subr.mxu0 0.0
        %1150 = vmatpush1.msra.mxu0 0.0
        %1151 = vmatprep.subr.mxu0 0.0
        %1152 = vmatpush1.msra.mxu0 0.0
        %1153 = vmatprep.subr.mxu0 0.0
        %1154 = vmatpush1.msra.mxu0 0.0
        %1155 = vmatprep.subr.mxu0 0.0
        %1156 = vmatpush1.msra.mxu0 0.0
        %1157 = vmatprep.subr.mxu0 0.0
        %1158 = vmatpush1.msra.mxu0 0.0
        %1159 = vmatprep.subr.mxu0 0.0
        %1160 = vmatpush1.msra.mxu0 0.0
        %1161 = vmatprep.subr.mxu0 0.0
        %1162 = vmatpush1.msra.mxu0 0.0
        %1163 = vmatprep.subr.mxu0 0.0
        %1164 = vmatpush1.msra.mxu0 0.0
        %1165 = vmatprep.subr.mxu0 0.0
        %1166 = vmatpush1.msra.mxu0 0.0
        %1167 = vmatprep.subr.mxu0 0.0
        %1168 = vmatpush1.msra.mxu0 0.0
        %1169 = vmatprep.subr.mxu0 0.0
        %1170 = vmatpush1.msra.mxu0 0.0
        %1171 = vmatprep.subr.mxu0 0.0
        %1172 = vmatpush1.msra.mxu0 0.0
        %1173 = vmatprep.subr.mxu0 0.0
        %1174 = vmatpush1.msra.mxu0 0.0
        %1175 = vmatprep.mubr.f32.mxu0 0.0
        %1176 = vmatmul.mubr.f32.gmra.mrb[0].mxu0 %v1109
        %v1177 = vpop.f32.mrb[0].mxu0
        %v1178 = vadd.f32 0.0, %v1177
        %v1179 = vpop.f32.mrb[0].mxu0
        %1180 = vdwg.mxu0
        %v1181 = vrcp.pop %v1101
        %v1182 = vmul.f32 %v1178, %v1181
        %1183 = vrot.lane.b32.xlu0 %v598, 120
        %v1184 = vpop.permute.xlu0 %1183
        %1185 = vrot.lane.b32.xlu0 %v599, 88
        %v1186 = vpop.permute.xlu0 %1185
        %1187 = vrot.lane.b32.xlu0 %v600, 88
        %v1188 = vpop.permute.xlu0 %1187
        %v1189 = vsel %vm906, %v1184, 0
        %v1191 = vsel %vm906, %v1186, 0
        %v1193 = vsel %vm906, %v1188, 0
        %1195 = vmatprep.subr.mxu0 0.0
        %1196 = vmatpush1.xpose.msra.mxu0 %v1191
        %1197 = vmatprep.subr.mxu0 0.0
        %1198 = vmatpush1.xpose.msra.mxu0 %v1193
        %1199 = vmatprep.subr.mxu0 0.0
        %1200 = vmatpush1.xpose.msra.mxu0 0.0
        %1201 = vmatprep.subr.mxu0 0.0
        %1202 = vmatpush1.xpose.msra.mxu0 0.0
        %1203 = vmatprep.subr.mxu0 0.0
        %1204 = vmatpush1.xpose.msra.mxu0 0.0
        %1205 = vmatprep.subr.mxu0 0.0
        %1206 = vmatpush1.xpose.msra.mxu0 0.0
        %1207 = vmatprep.subr.mxu0 0.0
        %1208 = vmatpush1.xpose.msra.mxu0 0.0
        %1209 = vmatprep.subr.mxu0 0.0
        %1210 = vmatpush1.xpose.msra.mxu0 0.0
        %1211 = vmatprep.subr.mxu0 0.0
        %1212 = vmatpush1.xpose.msra.mxu0 0.0
        %1213 = vmatprep.subr.mxu0 0.0
        %1214 = vmatpush1.xpose.msra.mxu0 0.0
        %1215 = vmatprep.subr.mxu0 0.0
        %1216 = vmatpush1.xpose.msra.mxu0 0.0
        %1217 = vmatprep.subr.mxu0 0.0
        %1218 = vmatpush1.xpose.msra.mxu0 0.0
        %1219 = vmatprep.subr.mxu0 0.0
        %1220 = vmatpush1.xpose.msra.mxu0 0.0
        %1221 = vmatprep.subr.mxu0 0.0
        %1222 = vmatpush1.xpose.msra.mxu0 0.0
        %1223 = vmatprep.subr.mxu0 0.0
        %1224 = vmatpush1.xpose.msra.mxu0 0.0
        %1225 = vmatprep.subr.mxu0 0.0
        %1226 = vmatpush1.xpose.msra.mxu0 0.0
        %1227 = vmatprep.subr.mxu0 0.0
        %1228 = vmatpush1.xpose.msra.mxu0 0.0
        %1229 = vmatprep.subr.mxu0 0.0
        %1230 = vmatpush1.xpose.msra.mxu0 0.0
        %1231 = vmatprep.subr.mxu0 0.0
        %1232 = vmatpush1.xpose.msra.mxu0 0.0
        %1233 = vmatprep.subr.mxu0 0.0
        %1234 = vmatpush1.xpose.msra.mxu0 0.0
        %1235 = vmatprep.subr.mxu0 0.0
        %1236 = vmatpush1.xpose.msra.mxu0 0.0
        %1237 = vmatprep.subr.mxu0 0.0
        %1238 = vmatpush1.xpose.msra.mxu0 0.0
        %1239 = vmatprep.subr.mxu0 0.0
        %1240 = vmatpush1.xpose.msra.mxu0 0.0
        %1241 = vmatprep.subr.mxu0 0.0
        %1242 = vmatpush1.xpose.msra.mxu0 0.0
        %1243 = vmatprep.subr.mxu0 0.0
        %1244 = vmatpush1.xpose.msra.mxu0 0.0
        %1245 = vmatprep.subr.mxu0 0.0
        %1246 = vmatpush1.xpose.msra.mxu0 0.0
        %1247 = vmatprep.subr.mxu0 0.0
        %1248 = vmatpush1.xpose.msra.mxu0 0.0
        %1249 = vmatprep.subr.mxu0 0.0
        %1250 = vmatpush1.xpose.msra.mxu0 0.0
        %1251 = vmatprep.subr.mxu0 0.0
        %1252 = vmatpush1.xpose.msra.mxu0 0.0
        %1253 = vmatprep.subr.mxu0 0.0
        %1254 = vmatpush1.xpose.msra.mxu0 0.0
        %1255 = vmatprep.subr.mxu0 0.0
        %1256 = vmatpush1.xpose.msra.mxu0 0.0
        %1257 = vmatprep.subr.mxu0 0.0
        %1258 = vmatpush1.xpose.msra.mxu0 0.0
        %1259 = vmatprep.mubr.f32.mxu0 0.0
        %1260 = vmatmul.mubr.f32.gmra.mrb[0].mxu0 %v1189
        %v1261 = vpop.f32.mrb[0].mxu0
        %v1262 = vadd.f32 0.0, %v1261
        %v1263 = vpop.f32.mrb[0].mxu0
        %1264 = vdwg.mxu0
        %v1265 = vmul.f32 %v1262, 0.35355338
        %v1266 = vadd.f32 %v1265, %v1088
        %v1267 = vsel %vm899, %v1266, -1e+30
        %v1268 = vsel %vm1092, %v1267, -inf
        %1269 = vmax.xlane.f32.xlu0 %v1268
        %v1270 = vpop.xlane.xlu0 %1269
        %v1271 = vsub.f32 %v1267, %v1270
        %v1272 = vmul.f32 %v1271, 1.442695
        %v1273 = vpow.pop %v1272
        %v1274 = vsel %vm1092, %v1273, 0.0
        %1275 = vadd.xlane.f32.xlu0 %v1274
        %v1276 = vpop.xlane.xlu0 %1275
        %1277 = vrot.lane.b32.xlu0 %v599, 56
        %v1278 = vpop.permute.xlu0 %1277
        %1279 = vrot.lane.b32.xlu0 %v600, 56
        %v1280 = vpop.permute.xlu0 %1279
        %v1284 = vsel %vm1092, %v1273, 0
        %1286 = vmatprep.subr.mxu0 0.0
        %1287 = vmatpush1.msra.mxu0 %v1278
        %1288 = vmatprep.subr.mxu0 0.0
        %1289 = vmatpush1.msra.mxu0 %v1280
        %1290 = vmatprep.subr.mxu0 0.0
        %1291 = vmatpush1.msra.mxu0 0.0
        %1292 = vmatprep.subr.mxu0 0.0
        %1293 = vmatpush1.msra.mxu0 0.0
        %1294 = vmatprep.subr.mxu0 0.0
        %1295 = vmatpush1.msra.mxu0 0.0
        %1296 = vmatprep.subr.mxu0 0.0
        %1297 = vmatpush1.msra.mxu0 0.0
        %1298 = vmatprep.subr.mxu0 0.0
        %1299 = vmatpush1.msra.mxu0 0.0
        %1300 = vmatprep.subr.mxu0 0.0
        %1301 = vmatpush1.msra.mxu0 0.0
        %1302 = vmatprep.subr.mxu0 0.0
        %1303 = vmatpush1.msra.mxu0 0.0
        %1304 = vmatprep.subr.mxu0 0.0
        %1305 = vmatpush1.msra.mxu0 0.0
        %1306 = vmatprep.subr.mxu0 0.0
        %1307 = vmatpush1.msra.mxu0 0.0
        %1308 = vmatprep.subr.mxu0 0.0
        %1309 = vmatpush1.msra.mxu0 0.0
        %1310 = vmatprep.subr.mxu0 0.0
        %1311 = vmatpush1.msra.mxu0 0.0
        %1312 = vmatprep.subr.mxu0 0.0
        %1313 = vmatpush1.msra.mxu0 0.0
        %1314 = vmatprep.subr.mxu0 0.0
        %1315 = vmatpush1.msra.mxu0 0.0
        %1316 = vmatprep.subr.mxu0 0.0
        %1317 = vmatpush1.msra.mxu0 0.0
        %1318 = vmatprep.subr.mxu0 0.0
        %1319 = vmatpush1.msra.mxu0 0.0
        %1320 = vmatprep.subr.mxu0 0.0
        %1321 = vmatpush1.msra.mxu0 0.0
        %1322 = vmatprep.subr.mxu0 0.0
        %1323 = vmatpush1.msra.mxu0 0.0
        %1324 = vmatprep.subr.mxu0 0.0
        %1325 = vmatpush1.msra.mxu0 0.0
        %1326 = vmatprep.subr.mxu0 0.0
        %1327 = vmatpush1.msra.mxu0 0.0
        %1328 = vmatprep.subr.mxu0 0.0
        %1329 = vmatpush1.msra.mxu0 0.0
        %1330 = vmatprep.subr.mxu0 0.0
        %1331 = vmatpush1.msra.mxu0 0.0
        %1332 = vmatprep.subr.mxu0 0.0
        %1333 = vmatpush1.msra.mxu0 0.0
        %1334 = vmatprep.subr.mxu0 0.0
        %1335 = vmatpush1.msra.mxu0 0.0
        %1336 = vmatprep.subr.mxu0 0.0
        %1337 = vmatpush1.msra.mxu0 0.0
        %1338 = vmatprep.subr.mxu0 0.0
        %1339 = vmatpush1.msra.mxu0 0.0
        %1340 = vmatprep.subr.mxu0 0.0
        %1341 = vmatpush1.msra.mxu0 0.0
        %1342 = vmatprep.subr.mxu0 0.0
        %1343 = vmatpush1.msra.mxu0 0.0
        %1344 = vmatprep.subr.mxu0 0.0
        %1345 = vmatpush1.msra.mxu0 0.0
        %1346 = vmatprep.subr.mxu0 0.0
        %1347 = vmatpush1.msra.mxu0 0.0
        %1348 = vmatprep.subr.mxu0 0.0
        %1349 = vmatpush1.msra.mxu0 0.0
        %1350 = vmatprep.mubr.f32.mxu0 0.0
        %1351 = vmatmul.mubr.f32.gmra.mrb[0].mxu0 %v1284
        %v1352 = vpop.f32.mrb[0].mxu0
        %v1353 = vadd.f32 0.0, %v1352
        %v1354 = vpop.f32.mrb[0].mxu0
        %1355 = vdwg.mxu0
        %v1356 = vrcp.pop %v1276
        %v1357 = vmul.f32 %v1353, %v1356
        %1358 = vrot.lane.b32.xlu0 %v598, 112
        %v1359 = vpop.permute.xlu0 %1358
        %1360 = vrot.lane.b32.xlu0 %v599, 80
        %v1361 = vpop.permute.xlu0 %1360
        %1362 = vrot.lane.b32.xlu0 %v600, 80
        %v1363 = vpop.permute.xlu0 %1362
        %v1364 = vsel %vm906, %v1359, 0
        %v1366 = vsel %vm906, %v1361, 0
        %v1368 = vsel %vm906, %v1363, 0
        %1370 = vmatprep.subr.mxu0 0.0
        %1371 = vmatpush1.xpose.msra.mxu0 %v1366
        %1372 = vmatprep.subr.mxu0 0.0
        %1373 = vmatpush1.xpose.msra.mxu0 %v1368
        %1374 = vmatprep.subr.mxu0 0.0
        %1375 = vmatpush1.xpose.msra.mxu0 0.0
        %1376 = vmatprep.subr.mxu0 0.0
        %1377 = vmatpush1.xpose.msra.mxu0 0.0
        %1378 = vmatprep.subr.mxu0 0.0
        %1379 = vmatpush1.xpose.msra.mxu0 0.0
        %1380 = vmatprep.subr.mxu0 0.0
        %1381 = vmatpush1.xpose.msra.mxu0 0.0
        %1382 = vmatprep.subr.mxu0 0.0
        %1383 = vmatpush1.xpose.msra.mxu0 0.0
        %1384 = vmatprep.subr.mxu0 0.0
        %1385 = vmatpush1.xpose.msra.mxu0 0.0
        %1386 = vmatprep.subr.mxu0 0.0
        %1387 = vmatpush1.xpose.msra.mxu0 0.0
        %1388 = vmatprep.subr.mxu0 0.0
        %1389 = vmatpush1.xpose.msra.mxu0 0.0
        %1390 = vmatprep.subr.mxu0 0.0
        %1391 = vmatpush1.xpose.msra.mxu0 0.0
        %1392 = vmatprep.subr.mxu0 0.0
        %1393 = vmatpush1.xpose.msra.mxu0 0.0
        %1394 = vmatprep.subr.mxu0 0.0
        %1395 = vmatpush1.xpose.msra.mxu0 0.0
        %1396 = vmatprep.subr.mxu0 0.0
        %1397 = vmatpush1.xpose.msra.mxu0 0.0
        %1398 = vmatprep.subr.mxu0 0.0
        %1399 = vmatpush1.xpose.msra.mxu0 0.0
        %1400 = vmatprep.subr.mxu0 0.0
        %1401 = vmatpush1.xpose.msra.mxu0 0.0
        %1402 = vmatprep.subr.mxu0 0.0
        %1403 = vmatpush1.xpose.msra.mxu0 0.0
        %1404 = vmatprep.subr.mxu0 0.0
        %1405 = vmatpush1.xpose.msra.mxu0 0.0
        %1406 = vmatprep.subr.mxu0 0.0
        %1407 = vmatpush1.xpose.msra.mxu0 0.0
        %1408 = vmatprep.subr.mxu0 0.0
        %1409 = vmatpush1.xpose.msra.mxu0 0.0
        %1410 = vmatprep.subr.mxu0 0.0
        %1411 = vmatpush1.xpose.msra.mxu0 0.0
        %1412 = vmatprep.subr.mxu0 0.0
        %1413 = vmatpush1.xpose.msra.mxu0 0.0
        %1414 = vmatprep.subr.mxu0 0.0
        %1415 = vmatpush1.xpose.msra.mxu0 0.0
        %1416 = vmatprep.subr.mxu0 0.0
        %1417 = vmatpush1.xpose.msra.mxu0 0.0
        %1418 = vmatprep.subr.mxu0 0.0
        %1419 = vmatpush1.xpose.msra.mxu0 0.0
        %1420 = vmatprep.subr.mxu0 0.0
        %1421 = vmatpush1.xpose.msra.mxu0 0.0
        %1422 = vmatprep.subr.mxu0 0.0
        %1423 = vmatpush1.xpose.msra.mxu0 0.0
        %1424 = vmatprep.subr.mxu0 0.0
        %1425 = vmatpush1.xpose.msra.mxu0 0.0
        %1426 = vmatprep.subr.mxu0 0.0
        %1427 = vmatpush1.xpose.msra.mxu0 0.0
        %1428 = vmatprep.subr.mxu0 0.0
        %1429 = vmatpush1.xpose.msra.mxu0 0.0
        %1430 = vmatprep.subr.mxu0 0.0
        %1431 = vmatpush1.xpose.msra.mxu0 0.0
        %1432 = vmatprep.subr.mxu0 0.0
        %1433 = vmatpush1.xpose.msra.mxu0 0.0
        %1434 = vmatprep.mubr.f32.mxu0 0.0
        %1435 = vmatmul.mubr.f32.gmra.mrb[0].mxu0 %v1364
        %v1436 = vpop.f32.mrb[0].mxu0
        %v1437 = vadd.f32 0.0, %v1436
        %v1438 = vpop.f32.mrb[0].mxu0
        %1439 = vdwg.mxu0
        %v1440 = vmul.f32 %v1437, 0.35355338
        %v1441 = vadd.f32 %v1440, %v1088
        %v1442 = vsel %vm899, %v1441, -1e+30
        %v1443 = vsel %vm1092, %v1442, -inf
        %1444 = vmax.xlane.f32.xlu0 %v1443
        %v1445 = vpop.xlane.xlu0 %1444
        %v1446 = vsub.f32 %v1442, %v1445
        %v1447 = vmul.f32 %v1446, 1.442695
        %v1448 = vpow.pop %v1447
        %v1449 = vsel %vm1092, %v1448, 0.0
        %1450 = vadd.xlane.f32.xlu0 %v1449
        %v1451 = vpop.xlane.xlu0 %1450
        %1452 = vrot.lane.b32.xlu0 %v599, 48
        %v1453 = vpop.permute.xlu0 %1452
        %1454 = vrot.lane.b32.xlu0 %v600, 48
        %v1455 = vpop.permute.xlu0 %1454
        %v1459 = vsel %vm1092, %v1448, 0
        %1461 = vmatprep.subr.mxu0 0.0
        %1462 = vmatpush1.msra.mxu0 %v1453
        %1463 = vmatprep.subr.mxu0 0.0
        %1464 = vmatpush1.msra.mxu0 %v1455
        %1465 = vmatprep.subr.mxu0 0.0
        %1466 = vmatpush1.msra.mxu0 0.0
        %1467 = vmatprep.subr.mxu0 0.0
        %1468 = vmatpush1.msra.mxu0 0.0
        %1469 = vmatprep.subr.mxu0 0.0
        %1470 = vmatpush1.msra.mxu0 0.0
        %1471 = vmatprep.subr.mxu0 0.0
        %1472 = vmatpush1.msra.mxu0 0.0
        %1473 = vmatprep.subr.mxu0 0.0
        %1474 = vmatpush1.msra.mxu0 0.0
        %1475 = vmatprep.subr.mxu0 0.0
        %1476 = vmatpush1.msra.mxu0 0.0
        %1477 = vmatprep.subr.mxu0 0.0
        %1478 = vmatpush1.msra.mxu0 0.0
        %1479 = vmatprep.subr.mxu0 0.0
        %1480 = vmatpush1.msra.mxu0 0.0
        %1481 = vmatprep.subr.mxu0 0.0
        %1482 = vmatpush1.msra.mxu0 0.0
        %1483 = vmatprep.subr.mxu0 0.0
        %1484 = vmatpush1.msra.mxu0 0.0
        %1485 = vmatprep.subr.mxu0 0.0
        %1486 = vmatpush1.msra.mxu0 0.0
        %1487 = vmatprep.subr.mxu0 0.0
        %1488 = vmatpush1.msra.mxu0 0.0
        %1489 = vmatprep.subr.mxu0 0.0
        %1490 = vmatpush1.msra.mxu0 0.0
        %1491 = vmatprep.subr.mxu0 0.0
        %1492 = vmatpush1.msra.mxu0 0.0
        %1493 = vmatprep.subr.mxu0 0.0
        %1494 = vmatpush1.msra.mxu0 0.0
        %1495 = vmatprep.subr.mxu0 0.0
        %1496 = vmatpush1.msra.mxu0 0.0
        %1497 = vmatprep.subr.mxu0 0.0
        %1498 = vmatpush1.msra.mxu0 0.0
        %1499 = vmatprep.subr.mxu0 0.0
        %1500 = vmatpush1.msra.mxu0 0.0
        %1501 = vmatprep.subr.mxu0 0.0
        %1502 = vmatpush1.msra.mxu0 0.0
        %1503 = vmatprep.subr.mxu0 0.0
        %1504 = vmatpush1.msra.mxu0 0.0
        %1505 = vmatprep.subr.mxu0 0.0
        %1506 = vmatpush1.msra.mxu0 0.0
        %1507 = vmatprep.subr.mxu0 0.0
        %1508 = vmatpush1.msra.mxu0 0.0
        %1509 = vmatprep.subr.mxu0 0.0
        %1510 = vmatpush1.msra.mxu0 0.0
        %1511 = vmatprep.subr.mxu0 0.0
        %1512 = vmatpush1.msra.mxu0 0.0
        %1513 = vmatprep.subr.mxu0 0.0
        %1514 = vmatpush1.msra.mxu0 0.0
        %1515 = vmatprep.subr.mxu0 0.0
        %1516 = vmatpush1.msra.mxu0 0.0
        %1517 = vmatprep.subr.mxu0 0.0
        %1518 = vmatpush1.msra.mxu0 0.0
        %1519 = vmatprep.subr.mxu0 0.0
        %1520 = vmatpush1.msra.mxu0 0.0
        %1521 = vmatprep.subr.mxu0 0.0
        %1522 = vmatpush1.msra.mxu0 0.0
        %1523 = vmatprep.subr.mxu0 0.0
        %1524 = vmatpush1.msra.mxu0 0.0
        %1525 = vmatprep.mubr.f32.mxu0 0.0
        %1526 = vmatmul.mubr.f32.gmra.mrb[0].mxu0 %v1459
        %v1527 = vpop.f32.mrb[0].mxu0
        %v1528 = vadd.f32 0.0, %v1527
        %v1529 = vpop.f32.mrb[0].mxu0
        %1530 = vdwg.mxu0
        %v1531 = vrcp.pop %v1451
        %v1532 = vmul.f32 %v1528, %v1531
        %1533 = vrot.lane.b32.xlu0 %v598, 104
        %v1534 = vpop.permute.xlu0 %1533
        %1535 = vrot.lane.b32.xlu0 %v599, 72
        %v1536 = vpop.permute.xlu0 %1535
        %1537 = vrot.lane.b32.xlu0 %v600, 72
        %v1538 = vpop.permute.xlu0 %1537
        %v1539 = vsel %vm906, %v1534, 0
        %v1541 = vsel %vm906, %v1536, 0
        %v1543 = vsel %vm906, %v1538, 0
        %1545 = vmatprep.subr.mxu0 0.0
        %1546 = vmatpush1.xpose.msra.mxu0 %v1541
        %1547 = vmatprep.subr.mxu0 0.0
        %1548 = vmatpush1.xpose.msra.mxu0 %v1543
        %1549 = vmatprep.subr.mxu0 0.0
        %1550 = vmatpush1.xpose.msra.mxu0 0.0
        %1551 = vmatprep.subr.mxu0 0.0
        %1552 = vmatpush1.xpose.msra.mxu0 0.0
        %1553 = vmatprep.subr.mxu0 0.0
        %1554 = vmatpush1.xpose.msra.mxu0 0.0
        %1555 = vmatprep.subr.mxu0 0.0
        %1556 = vmatpush1.xpose.msra.mxu0 0.0
        %1557 = vmatprep.subr.mxu0 0.0
        %1558 = vmatpush1.xpose.msra.mxu0 0.0
        %1559 = vmatprep.subr.mxu0 0.0
        %1560 = vmatpush1.xpose.msra.mxu0 0.0
        %1561 = vmatprep.subr.mxu0 0.0
        %1562 = vmatpush1.xpose.msra.mxu0 0.0
        %1563 = vmatprep.subr.mxu0 0.0
        %1564 = vmatpush1.xpose.msra.mxu0 0.0
        %1565 = vmatprep.subr.mxu0 0.0
        %1566 = vmatpush1.xpose.msra.mxu0 0.0
        %1567 = vmatprep.subr.mxu0 0.0
        %1568 = vmatpush1.xpose.msra.mxu0 0.0
        %1569 = vmatprep.subr.mxu0 0.0
        %1570 = vmatpush1.xpose.msra.mxu0 0.0
        %1571 = vmatprep.subr.mxu0 0.0
        %1572 = vmatpush1.xpose.msra.mxu0 0.0
        %1573 = vmatprep.subr.mxu0 0.0
        %1574 = vmatpush1.xpose.msra.mxu0 0.0
        %1575 = vmatprep.subr.mxu0 0.0
        %1576 = vmatpush1.xpose.msra.mxu0 0.0
        %1577 = vmatprep.subr.mxu0 0.0
        %1578 = vmatpush1.xpose.msra.mxu0 0.0
        %1579 = vmatprep.subr.mxu0 0.0
        %1580 = vmatpush1.xpose.msra.mxu0 0.0
        %1581 = vmatprep.subr.mxu0 0.0
        %1582 = vmatpush1.xpose.msra.mxu0 0.0
        %1583 = vmatprep.subr.mxu0 0.0
        %1584 = vmatpush1.xpose.msra.mxu0 0.0
        %1585 = vmatprep.subr.mxu0 0.0
        %1586 = vmatpush1.xpose.msra.mxu0 0.0
        %1587 = vmatprep.subr.mxu0 0.0
        %1588 = vmatpush1.xpose.msra.mxu0 0.0
        %1589 = vmatprep.subr.mxu0 0.0
        %1590 = vmatpush1.xpose.msra.mxu0 0.0
        %1591 = vmatprep.subr.mxu0 0.0
        %1592 = vmatpush1.xpose.msra.mxu0 0.0
        %1593 = vmatprep.subr.mxu0 0.0
        %1594 = vmatpush1.xpose.msra.mxu0 0.0
        %1595 = vmatprep.subr.mxu0 0.0
        %1596 = vmatpush1.xpose.msra.mxu0 0.0
        %1597 = vmatprep.subr.mxu0 0.0
        %1598 = vmatpush1.xpose.msra.mxu0 0.0
        %1599 = vmatprep.subr.mxu0 0.0
        %1600 = vmatpush1.xpose.msra.mxu0 0.0
        %1601 = vmatprep.subr.mxu0 0.0
        %1602 = vmatpush1.xpose.msra.mxu0 0.0
        %1603 = vmatprep.subr.mxu0 0.0
        %1604 = vmatpush1.xpose.msra.mxu0 0.0
        %1605 = vmatprep.subr.mxu0 0.0
        %1606 = vmatpush1.xpose.msra.mxu0 0.0
        %1607 = vmatprep.subr.mxu0 0.0
        %1608 = vmatpush1.xpose.msra.mxu0 0.0
        %1609 = vmatprep.mubr.f32.mxu0 0.0
        %1610 = vmatmul.mubr.f32.gmra.mrb[0].mxu0 %v1539
        %v1611 = vpop.f32.mrb[0].mxu0
        %v1612 = vadd.f32 0.0, %v1611
        %v1613 = vpop.f32.mrb[0].mxu0
        %1614 = vdwg.mxu0
        %v1615 = vmul.f32 %v1612, 0.35355338
        %v1616 = vadd.f32 %v1615, %v1088
        %v1617 = vsel %vm899, %v1616, -1e+30
        %v1618 = vsel %vm1092, %v1617, -inf
        %1619 = vmax.xlane.f32.xlu0 %v1618
        %v1620 = vpop.xlane.xlu0 %1619
        %v1621 = vsub.f32 %v1617, %v1620
        %v1622 = vmul.f32 %v1621, 1.442695
        %v1623 = vpow.pop %v1622
        %v1624 = vsel %vm1092, %v1623, 0.0
        %1625 = vadd.xlane.f32.xlu0 %v1624
        %v1626 = vpop.xlane.xlu0 %1625
        %1627 = vrot.lane.b32.xlu0 %v599, 40
        %v1628 = vpop.permute.xlu0 %1627
        %1629 = vrot.lane.b32.xlu0 %v600, 40
        %v1630 = vpop.permute.xlu0 %1629
        %v1634 = vsel %vm1092, %v1623, 0
        %1636 = vmatprep.subr.mxu0 0.0
        %1637 = vmatpush1.msra.mxu0 %v1628
        %1638 = vmatprep.subr.mxu0 0.0
        %1639 = vmatpush1.msra.mxu0 %v1630
        %1640 = vmatprep.subr.mxu0 0.0
        %1641 = vmatpush1.msra.mxu0 0.0
        %1642 = vmatprep.subr.mxu0 0.0
        %1643 = vmatpush1.msra.mxu0 0.0
        %1644 = vmatprep.subr.mxu0 0.0
        %1645 = vmatpush1.msra.mxu0 0.0
        %1646 = vmatprep.subr.mxu0 0.0
        %1647 = vmatpush1.msra.mxu0 0.0
        %1648 = vmatprep.subr.mxu0 0.0
        %1649 = vmatpush1.msra.mxu0 0.0
        %1650 = vmatprep.subr.mxu0 0.0
        %1651 = vmatpush1.msra.mxu0 0.0
        %1652 = vmatprep.subr.mxu0 0.0
        %1653 = vmatpush1.msra.mxu0 0.0
        %1654 = vmatprep.subr.mxu0 0.0
        %1655 = vmatpush1.msra.mxu0 0.0
        %1656 = vmatprep.subr.mxu0 0.0
        %1657 = vmatpush1.msra.mxu0 0.0
        %1658 = vmatprep.subr.mxu0 0.0
        %1659 = vmatpush1.msra.mxu0 0.0
        %1660 = vmatprep.subr.mxu0 0.0
        %1661 = vmatpush1.msra.mxu0 0.0
        %1662 = vmatprep.subr.mxu0 0.0
        %1663 = vmatpush1.msra.mxu0 0.0
        %1664 = vmatprep.subr.mxu0 0.0
        %1665 = vmatpush1.msra.mxu0 0.0
        %1666 = vmatprep.subr.mxu0 0.0
        %1667 = vmatpush1.msra.mxu0 0.0
        %1668 = vmatprep.subr.mxu0 0.0
        %1669 = vmatpush1.msra.mxu0 0.0
        %1670 = vmatprep.subr.mxu0 0.0
        %1671 = vmatpush1.msra.mxu0 0.0
        %1672 = vmatprep.subr.mxu0 0.0
        %1673 = vmatpush1.msra.mxu0 0.0
        %1674 = vmatprep.subr.mxu0 0.0
        %1675 = vmatpush1.msra.mxu0 0.0
        %1676 = vmatprep.subr.mxu0 0.0
        %1677 = vmatpush1.msra.mxu0 0.0
        %1678 = vmatprep.subr.mxu0 0.0
        %1679 = vmatpush1.msra.mxu0 0.0
        %1680 = vmatprep.subr.mxu0 0.0
        %1681 = vmatpush1.msra.mxu0 0.0
        %1682 = vmatprep.subr.mxu0 0.0
        %1683 = vmatpush1.msra.mxu0 0.0
        %1684 = vmatprep.subr.mxu0 0.0
        %1685 = vmatpush1.msra.mxu0 0.0
        %1686 = vmatprep.subr.mxu0 0.0
        %1687 = vmatpush1.msra.mxu0 0.0
        %1688 = vmatprep.subr.mxu0 0.0
        %1689 = vmatpush1.msra.mxu0 0.0
        %1690 = vmatprep.subr.mxu0 0.0
        %1691 = vmatpush1.msra.mxu0 0.0
        %1692 = vmatprep.subr.mxu0 0.0
        %1693 = vmatpush1.msra.mxu0 0.0
        %1694 = vmatprep.subr.mxu0 0.0
        %1695 = vmatpush1.msra.mxu0 0.0
        %1696 = vmatprep.subr.mxu0 0.0
        %1697 = vmatpush1.msra.mxu0 0.0
        %1698 = vmatprep.subr.mxu0 0.0
        %1699 = vmatpush1.msra.mxu0 0.0
        %1700 = vmatprep.mubr.f32.mxu0 0.0
        %1701 = vmatmul.mubr.f32.gmra.mrb[0].mxu0 %v1634
        %v1702 = vpop.f32.mrb[0].mxu0
        %v1703 = vadd.f32 0.0, %v1702
        %v1704 = vpop.f32.mrb[0].mxu0
        %1705 = vdwg.mxu0
        %v1706 = vrcp.pop %v1626
        %v1707 = vmul.f32 %v1703, %v1706
        %1709 = vrot.lane.b32.xlu0 %v1357, 8
        %v1710 = vpop.permute.xlu0 %1709
        %1713 = vrot.lane.b32.xlu0 %v1532, 16
        %v1714 = vpop.permute.xlu0 %1713
        %1717 = vrot.lane.b32.xlu0 %v1707, 24
        %v1718 = vpop.permute.xlu0 %1717
        %v1720 = vsel %vm906, %v1182, %v1710
        %v1721 = vsel %vm1092, %v1720, %v1714
        %vm1722 = vcmask 195584
        %v1723 = vsel %vm1722, %v1721, %v1718
        %v1724 = vld [vmem:[%s9] sm:$0xff]
        %v1725 = vld [vmem:[%s9 + $0x8] sm:$0xff]
        %v1726 = vld [vmem:[%s9 + $0x10] sm:$0xff]
        %v1727 = vld [vmem:[%s9 + $0x18] sm:$0xff]
        %v1728 = vld [vmem:[%s10] sm:$0x1]
        %v1730 = vlaneseq
        %v1731 = vshrl.u32 %v1730, 7
        %v1732 = vsub.s32 0, %v1731
        %v1733 = vrot.slane %v1728, %v1732
        %vm1735 = vcmask 261120
        %v1737 = vsel %vm1735, %v1723, 0
        %1739 = vmatprep.subr.mxu0 0.0
        %1740 = vmatpush1.msra.mxu0 %v1724
        %1741 = vmatprep.subr.mxu0 0.0
        %1742 = vmatpush1.msra.mxu0 %v1725
        %1743 = vmatprep.subr.mxu0 0.0
        %1744 = vmatpush1.msra.mxu0 %v1726
        %1745 = vmatprep.subr.mxu0 0.0
        %1746 = vmatpush1.msra.mxu0 %v1727
        %1747 = vmatprep.subr.mxu0 0.0
        %1748 = vmatpush1.msra.mxu0 0.0
        %1749 = vmatprep.subr.mxu0 0.0
        %1750 = vmatpush1.msra.mxu0 0.0
        %1751 = vmatprep.subr.mxu0 0.0
        %1752 = vmatpush1.msra.mxu0 0.0
        %1753 = vmatprep.subr.mxu0 0.0
        %1754 = vmatpush1.msra.mxu0 0.0
        %1755 = vmatprep.subr.mxu0 0.0
        %1756 = vmatpush1.msra.mxu0 0.0
        %1757 = vmatprep.subr.mxu0 0.0
        %1758 = vmatpush1.msra.mxu0 0.0
        %1759 = vmatprep.subr.mxu0 0.0
        %1760 = vmatpush1.msra.mxu0 0.0
        %1761 = vmatprep.subr.mxu0 0.0
        %1762 = vmatpush1.msra.mxu0 0.0
        %1763 = vmatprep.subr.mxu0 0.0
        %1764 = vmatpush1.msra.mxu0 0.0
        %1765 = vmatprep.subr.mxu0 0.0
        %1766 = vmatpush1.msra.mxu0 0.0
        %1767 = vmatprep.subr.mxu0 0.0
        %1768 = vmatpush1.msra.mxu0 0.0
        %1769 = vmatprep.subr.mxu0 0.0
        %1770 = vmatpush1.msra.mxu0 0.0
        %1771 = vmatprep.subr.mxu0 0.0
        %1772 = vmatpush1.msra.mxu0 0.0
        %1773 = vmatprep.subr.mxu0 0.0
        %1774 = vmatpush1.msra.mxu0 0.0
        %1775 = vmatprep.subr.mxu0 0.0
        %1776 = vmatpush1.msra.mxu0 0.0
        %1777 = vmatprep.subr.mxu0 0.0
        %1778 = vmatpush1.msra.mxu0 0.0
        %1779 = vmatprep.subr.mxu0 0.0
        %1780 = vmatpush1.msra.mxu0 0.0
        %1781 = vmatprep.subr.mxu0 0.0
        %1782 = vmatpush1.msra.mxu0 0.0
        %1783 = vmatprep.subr.mxu0 0.0
        %1784 = vmatpush1.msra.mxu0 0.0
        %1785 = vmatprep.subr.mxu0 0.0
        %1786 = vmatpush1.msra.mxu0 0.0
        %1787 = vmatprep.subr.mxu0 0.0
        %1788 = vmatpush1.msra.mxu0 0.0
        %1789 = vmatprep.subr.mxu0 0.0
        %1790 = vmatpush1.msra.mxu0 0.0
        %1791 = vmatprep.subr.mxu0 0.0
        %1792 = vmatpush1.msra.mxu0 0.0
        %1793 = vmatprep.subr.mxu0 0.0
        %1794 = vmatpush1.msra.mxu0 0.0
        %1795 = vmatprep.subr.mxu0 0.0
        %1796 = vmatpush1.msra.mxu0 0.0
        %1797 = vmatprep.subr.mxu0 0.0
        %1798 = vmatpush1.msra.mxu0 0.0
        %1799 = vmatprep.subr.mxu0 0.0
        %1800 = vmatpush1.msra.mxu0 0.0
        %1801 = vmatprep.subr.mxu0 0.0
        %1802 = vmatpush1.msra.mxu0 0.0
        %1803 = vmatprep.mubr.f32.mxu0 0.0
        %1804 = vmatmul.mubr.f32.gmra.mrb[0].mxu0 %v1737
        %v1805 = vpop.f32.mrb[0].mxu0
        %v1806 = vadd.f32 %v1733, %v1805
        %v1807 = vpop.f32.mrb[0].mxu0
        %1808 = vdwg.mxu0
        %1809 = vst [vmem:[%s493] sm:$0xff] %v1806
        %s1810 = sand.u32 %s285, 1
        %s1811 = scalar_lea.sflag [#allocation8], %s1810
        %s1812 = sand.u32 %s285, 1
        %s1813 = smul.addr %s1812, 8
        %s1814 = scalar_lea.vmem [#allocation17], %s1813
        // Predicated region
        $region89: #{tpu_custom_call.1} parent=59 // pred_check
          %p1815 = pneg %p295
        $region90: #{tpu_custom_call.1} parent=59 // pred_check_branch
          %1817 = sbr.rel (%p1815) target = $region92
        $region91: #{tpu_custom_call.1} parent=59 // pred_region
          %s1819 = ssub.s32 128, 128
          %1820 = vsyncadd %s1811, %s1819
          %s1821 = smul.addr %s45, 2
          %s1822 = sadd.s32 %s46, %s1821
          %s1823 = smul.addr %s1822, 128
          %s1824 = scalar_lea.hbm %s11, %s1823
          %s1826 = sshll.u32 %s1814, 4
          %s1827 = int_to_ptr.vmem [resolvable:$true] %s1826
          %1829 = dma.vmem_to_hbm [thread:$0]  %s1827, 128, %s1824, %s1811
        $region92: #{tpu_custom_call.1} parent=59 // pred_fallthru
          _
      $region60: #{tpu_custom_call.1} parent=5 // pred_fallthru
        _
      %p1830 = scmp.le.s32.totalorder 2, %s36
      // Predicated region
      $region93: #{tpu_custom_call.1} parent=5 // pred_check
        %p1831 = pneg %p1830
      $region94: #{tpu_custom_call.1} parent=5 // pred_check_branch
        %1833 = sbr.rel (%p1831) target = $region96
      $region95: #{tpu_custom_call.1} parent=5 // pred_region
        %s1834 = ssub.s32 %s36, 2
        // Predicated region
        $region97: #{tpu_custom_call.1} parent=95 // pred_check
          %p1835 = pneg %p301
        $region98: #{tpu_custom_call.1} parent=95 // pred_check_branch
          %1837 = sbr.rel (%p1835) target = $region100
        $region99: #{tpu_custom_call.1} parent=95 // pred_region
          %s1838 = sand.u32 %s286, 1
          %s1839 = scalar_lea.sflag [#allocation8], %s1838
          %s1840 = sand.u32 %s286, 1
          %s1841 = smul.addr %s1840, 8
          %s1842 = scalar_lea.vmem [#allocation17], %s1841
          %1843 = dma.done %s1839, 128
        $region100: #{tpu_custom_call.1} parent=95 // pred_fallthru
          _
      $region96: #{tpu_custom_call.1} parent=5 // pred_fallthru
        _
    $region6: #{tpu_custom_call.1} parent=1 // loop_footer
      %s40 = sadd.s32 1, %s36
    $region7: #{tpu_custom_call.1} parent=1 // loop_footer_branch
      %35 = sbr.rel target = $region3
    $region8: #{tpu_custom_call.1} parent=1 // loop_exit
      _
    %1844 = vsyncpa [#allocation7], 1
    %s1845 = scalar_lea.sflag [#allocation7], 1
    %1846 = vsyncpa %s1845, 1
    %1847 = vsyncpa [#allocation10], 1
    %s1848 = scalar_lea.sflag [#allocation10], 1
    %1849 = vsyncpa %s1848, 1
    %1850 = vsyncpa [#allocation13], 1
    %1851 = vsyncpa [#allocation16], 1
    %1852 = vsyncpa [#allocation8], 1
    %s1853 = scalar_lea.sflag [#allocation8], 1
    %1854 = vsyncpa %s1853, 1

</llo_original>
